<compile_context>
chip_gen: v6e
topology: v6e:2x2x1
jax: 0.10.0
libtpu: 0.0.40
codegen_flags: <defaults>
</compile_context>

<pallas_src>
import functools

import jax
import jax.numpy as jnp
from jax import lax
from jax.experimental import pallas as pl
from jax.experimental.pallas import tpu as pltpu


# ----------------------------------------------------------------------------
# Fused kernel: expand matmul + 2x2 patch rearrange + LayerNorm
# ----------------------------------------------------------------------------
def _patch_expand_kernel(x_ref, w_ref, g_ref, b_ref, o_ref, *, eps, compute_dtype):
    # x_ref: (tm, dim)        tm = th * W tokens, original activation dtype
    # w_ref: (2, dim, 2c)     expand weight, p1-major (compute dtype)
    # g_ref: (1, 2c) f32      LayerNorm gamma, tiled twice along lanes (p2=0|1)
    # b_ref: (1, 2c) f32      LayerNorm beta,  tiled twice along lanes
    # o_ref: (th, 2, W, 2c)   output block in the final (B, 2H, 2W, c) layout
    th, _, w_tok, two_c = o_ref.shape
    c = two_c // 2

    x = x_ref[...].astype(compute_dtype)         # in-kernel cast (no extra HBM pass)
    gamma = g_ref[...]                           # (1, 2c) f32
    beta = b_ref[...]                            # (1, 2c) f32

    # Lane mask selecting the p2 == 0 half of the 2c output channels.
    lane = lax.broadcasted_iota(jnp.int32, (1, two_c), 1)
    left = lane < c
    inv_c = 1.0 / float(c)

    for p1 in range(2):
        # (tm, dim) @ (dim, 2c) on the MXU, f32 accumulation.  w_ref[p1] is a
        # free ref slice along the leading axis (fully lane-aligned operand).
        y = jnp.dot(x, w_ref[p1], preferred_element_type=jnp.float32)   # (tm, 2c)

        # Per-half LayerNorm stats via masked lane reductions -- avoids
        # value-level slices at non-128-aligned lane offsets (c = 48/96/192).
        s_all = jnp.sum(y, axis=-1, keepdims=True)
        s0 = jnp.sum(jnp.where(left, y, 0.0), axis=-1, keepdims=True)
        mu = jnp.where(left, s0, s_all - s0) * inv_c                    # (tm, 2c)
        ctr = y - mu
        sq = ctr * ctr
        q_all = jnp.sum(sq, axis=-1, keepdims=True)
        q0 = jnp.sum(jnp.where(left, sq, 0.0), axis=-1, keepdims=True)
        var = jnp.where(left, q0, q_all - q0) * inv_c
        ln = ctr * lax.rsqrt(var + eps) * gamma + beta                  # (tm, 2c) f32

        # One full-width (lane-dense, unmasked) store per p1 half, written
        # directly into its final location in the rearranged output.
        o_ref[:, p1:p1 + 1, :, :] = ln.reshape(th, 1, w_tok, two_c).astype(o_ref.dtype)


# ----------------------------------------------------------------------------
# Tiling helpers
# ----------------------------------------------------------------------------
def _vmem_capacity_bytes():
    try:
        return int(pltpu.get_tpu_info().vmem_capacity_bytes)
    except Exception:
        return 64 * 1024 * 1024          # conservative default (v7x per-TC VMEM)


def _pick_row_tile(n_rows, w_tok, max_tokens):
    """Largest divisor th of n_rows with th*W <= max_tokens and th*W % 8 == 0
    (or the full array), preferring an even grid length (v7x has 2 TCs)."""
    divs = [d for d in range(1, n_rows + 1) if n_rows % d == 0]
    valid = [d for d in divs if (d * w_tok) % 8 == 0 or d == n_rows]
    fitting = [d for d in valid if d * w_tok <= max_tokens]
    pool = fitting if fitting else [min(valid)]   # graceful fallback: smallest legal tile
    even = [d for d in pool if (n_rows // d) % 2 == 0]
    return max(even) if even else max(pool)


# ----------------------------------------------------------------------------
# One-time parameter preparation (hoisted out of the per-call path)
# ----------------------------------------------------------------------------
def prepare_patch_expand_params(params, dim, *, compute_dtype=jnp.bfloat16):
    """Layout/cast the PyTorch-layout parameters once.

    params: {"expand_w": (2*dim, dim), "norm_w": (dim//2,), "norm_b": (dim//2,)}
    Returns: {"w": (2, dim, dim) compute_dtype, "gamma2": (1, dim) f32,
              "beta2": (1, dim) f32}
    compute_dtype=bf16 is an explicit speed/accuracy choice (f32 accumulation
    is always used); pass jnp.float32 for bit-closer-to-PyTorch results.
    """
    assert dim % 2 == 0
    c = dim // 2
    w_t = jnp.transpose(params["expand_w"])                      # (dim, 4c)
    w = jnp.transpose(w_t.reshape(dim, 2, 2 * c), (1, 0, 2))     # (2, dim, 2c), p1-major
    gamma2 = jnp.concatenate([params["norm_w"], params["norm_w"]]).reshape(1, 2 * c)
    beta2 = jnp.concatenate([params["norm_b"], params["norm_b"]]).reshape(1, 2 * c)
    return {
        "w": w.astype(compute_dtype),
        "gamma2": gamma2.astype(jnp.float32),
        "beta2": beta2.astype(jnp.float32),
    }


# ----------------------------------------------------------------------------
# Public forward (matches PatchExpand.forward, dim_scale == 2)
# ----------------------------------------------------------------------------
def patch_expand_forward(x, prepared, input_resolution, *, eps=1e-5, out_dtype=None):
    """x: (B, H*W, dim) -> (B, 4*H*W, dim // 2).  Output dtype defaults to x.dtype."""
    # TODO(synk): dim_scale != 2 path (nn.Identity expand + LayerNorm(dim//dim_scale))
    # is not implemented; Swin-UNet's decoder only instantiates dim_scale == 2.
    H, W = input_resolution
    B, L, dim = x.shape
    assert L == H * W, "input feature has wrong size"
    assert dim % 2 == 0
    c = dim // 2
    two_c = 2 * c
    compute_dtype = prepared["w"].dtype
    out_dtype = x.dtype if out_dtype is None else out_dtype

    n_rows = B * H
    x2d = x.reshape(n_rows * W, dim)                 # free reshape, no dtype cast

    # --- VMEM-budget-aware tile selection ------------------------------------
    phys = _vmem_capacity_bytes()
    base_limit = min(phys * 3 // 4, 96 * 1024 * 1024)    # ~96 MiB v5e/v6e, ~48 MiB v7x
    token_cap = 2048 if phys >= 100 * 1024 * 1024 else 1024

    def _isz(dt):
        return jnp.dtype(dt).itemsize

    w_vmem = 2 * (2 * dim * two_c) * _isz(compute_dtype)          # double-buffered weight
    # per-token VMEM: double-buffered input + output blocks + compute temporaries
    per_token = (2 * dim * _isz(x.dtype)
                 + 2 * (2 * dim) * _isz(out_dtype)
                 + 12 * dim)
    usable = max(base_limit - w_vmem - 2 * 1024 * 1024, per_token * 8)
    max_tokens = max(8, min(token_cap, usable // per_token))

    th = _pick_row_tile(n_rows, W, max_tokens)
    tm = th * W
    grid = (n_rows // th,)

    needed = per_token * tm + w_vmem + 4 * 1024 * 1024
    vmem_limit = int(min(max(base_limit, needed, 32 * 1024 * 1024),
                         phys - 8 * 1024 * 1024))

    out = pl.pallas_call(
        functools.partial(_patch_expand_kernel, eps=eps, compute_dtype=compute_dtype),
        out_shape=jax.ShapeDtypeStruct((n_rows, 2, W, two_c), out_dtype),
        grid=grid,
        in_specs=[
            pl.BlockSpec((tm, dim), lambda i: (i, 0)),
            pl.BlockSpec((2, dim, two_c), lambda i: (0, 0, 0)),    # constant -> resident
            pl.BlockSpec((1, two_c), lambda i: (0, 0)),
            pl.BlockSpec((1, two_c), lambda i: (0, 0)),
        ],
        out_specs=pl.BlockSpec((th, 2, W, two_c), lambda i: (i, 0, 0, 0)),
        compiler_params=pltpu.CompilerParams(
            dimension_semantics=("parallel",),
            vmem_limit_bytes=vmem_limit,
        ),
    )(x2d, prepared["w"], prepared["gamma2"], prepared["beta2"])

    # (n_rows, 2, W, 2c) row-major is identical to (B, 2H, 2W, c): free reshape.
    return out.reshape(B, 4 * H * W, c)


# ----------------------------------------------------------------------------
# Pure-JAX reference (for correctness check)
# ----------------------------------------------------------------------------
def patch_expand_reference(x, params, input_resolution, eps=1e-5):
    H, W = input_resolution
    B, L, dim = x.shape
    c = dim // 2
    y = x.astype(jnp.float32) @ jnp.transpose(params["expand_w"]).astype(jnp.float32)
    y = y.reshape(B, H, W, 2, 2, c)
    y = jnp.transpose(y, (0, 1, 3, 2, 4, 5)).reshape(B, 4 * H * W, c)
    mu = jnp.mean(y, axis=-1, keepdims=True)
    var = jnp.mean((y - mu) ** 2, axis=-1, keepdims=True)
    yn = (y - mu) / jnp.sqrt(var + eps)
    return yn * params["norm_w"] + params["norm_b"]


if __name__ == "__main__":
    B, H, W, dim = 2, 8, 8, 256          # small, lane-friendly stand-in
    c = dim // 2
    key = jax.random.PRNGKey(0)
    kx, kw, kg, kb = jax.random.split(key, 4)

    x = jax.random.normal(kx, (B, H * W, dim), jnp.float32)
    bound = 1.0 / (dim ** 0.5)
    raw_params = {
        "expand_w": jax.random.uniform(kw, (2 * dim, dim), jnp.float32, -bound, bound),
        "norm_w": 1.0 + 0.1 * jax.random.normal(kg, (c,), jnp.float32),
        "norm_b": 0.1 * jax.random.normal(kb, (c,), jnp.float32),
    }

    prepared = prepare_patch_expand_params(raw_params, dim)   # one-time layout/cast

    fwd = jax.jit(functools.partial(patch_expand_forward, input_resolution=(H, W)))
    out = jax.block_until_ready(fwd(x, prepared))

    assert out.shape == (B, 4 * H * W, c), out.shape
    assert out.dtype == x.dtype, out.dtype

    ref = patch_expand_reference(x, raw_params, (H, W))
    max_err = float(jnp.max(jnp.abs(out.astype(jnp.float32) - ref)))
    assert jnp.allclose(out.astype(jnp.float32), ref, atol=5e-2, rtol=5e-2), max_err

    print("KERNEL_OK")
</pallas_src>

<mosaic_0001>
module attributes {stable_mosaic.version = 11 : i64} {
  func.func @_patch_expand_kernel(%arg0: i32, %arg1: memref<64x256xf32, #tpu.memory_space<vmem>>, %arg2: memref<2x256x256xbf16, #tpu.memory_space<vmem>>, %arg3: memref<1x256xf32, #tpu.memory_space<vmem>>, %arg4: memref<1x256xf32, #tpu.memory_space<vmem>>, %arg5: memref<8x2x8x256xf32, #tpu.memory_space<vmem>>) attributes {dimension_semantics = [#tpu.dimension_semantics<parallel>], iteration_bounds = array<i64: 2>, scalar_prefetch = 0 : i64, scratch_operands = 0 : i64, tpu.core_type = #tpu.core_type<tc>, window_params = [{transform_indices = @transform_0, window_bounds = array<i64: 64, 256>}, {pipeline_mode = #tpu.pipeline_mode<synchronous>, transform_indices = @transform_1, window_bounds = array<i64: 2, 256, 256>}, {pipeline_mode = #tpu.pipeline_mode<synchronous>, transform_indices = @transform_2, window_bounds = array<i64: 1, 256>}, {pipeline_mode = #tpu.pipeline_mode<synchronous>, transform_indices = @transform_3, window_bounds = array<i64: 1, 256>}, {transform_indices = @transform_4, window_bounds = array<i64: 8, 2, 8, 256>}]} {
    %c0 = arith.constant 0 : index
    %c0_0 = arith.constant 0 : index
    %0 = vector.load %arg1[%c0, %c0_0] : memref<64x256xf32, #tpu.memory_space<vmem>>, vector<64x256xf32>
    %1 = arith.truncf %0 : vector<64x256xf32> to vector<64x256xbf16>
    %c0_1 = arith.constant 0 : index
    %c0_2 = arith.constant 0 : index
    %2 = vector.load %arg3[%c0_1, %c0_2] : memref<1x256xf32, #tpu.memory_space<vmem>>, vector<1x256xf32>
    %c0_3 = arith.constant 0 : index
    %c0_4 = arith.constant 0 : index
    %3 = vector.load %arg4[%c0_3, %c0_4] : memref<1x256xf32, #tpu.memory_space<vmem>>, vector<1x256xf32>
    %4 = tpu.iota {dimensions = array<i32: 1>} : vector<1x256xi32>
    %c128_i32 = arith.constant 128 : i32
    %5 = vector.broadcast %c128_i32 : i32 to vector<1x256xi32>
    %6 = arith.cmpi slt, %4, %5 : vector<1x256xi32>
    %c0_5 = arith.constant 0 : index
    %c0_6 = arith.constant 0 : index
    %c0_7 = arith.constant 0 : index
    %7 = vector.load %arg2[%c0_5, %c0_6, %c0_7] : memref<2x256x256xbf16, #tpu.memory_space<vmem>>, vector<1x256x256xbf16>
    %8 = vector.shape_cast %7 : vector<1x256x256xbf16> to vector<256x256xbf16>
    %cst = arith.constant dense<0.000000e+00> : vector<64x256xf32>
    %9 = tpu.matmul %1, %8, %cst {dimension_numbers = #tpu.dot_dimension_numbers<[1], [0], [0], [1], [0, 0, 1, 1], [], []>} : vector<64x256xbf16>, vector<256x256xbf16>, vector<64x256xf32> -> vector<64x256xf32>
    %cst_8 = arith.constant dense<0.000000e+00> : vector<64xf32>
    %10 = vector.multi_reduction <add>, %9, %cst_8 [1] : vector<64x256xf32> to vector<64xf32>
    %11 = vector.shape_cast %10 : vector<64xf32> to vector<64x1xf32>
    %cst_9 = arith.constant 0.000000e+00 : f32
    %12 = vector.shape_cast %6 : vector<1x256xi1> to vector<1x256xi1>
    %13 = vector.broadcast %12 : vector<1x256xi1> to vector<64x256xi1>
    %14 = vector.broadcast %cst_9 : f32 to vector<64x256xf32>
    %15 = arith.select %13, %9, %14 : vector<64x256xi1>, vector<64x256xf32>
    %cst_10 = arith.constant dense<0.000000e+00> : vector<64xf32>
    %16 = vector.multi_reduction <add>, %15, %cst_10 [1] : vector<64x256xf32> to vector<64xf32>
    %17 = vector.shape_cast %16 : vector<64xf32> to vector<64x1xf32>
    %18 = arith.subf %11, %17 : vector<64x1xf32>
    %19 = vector.shape_cast %6 : vector<1x256xi1> to vector<1x256xi1>
    %20 = vector.broadcast %19 : vector<1x256xi1> to vector<64x256xi1>
    %21 = vector.shape_cast %17 : vector<64x1xf32> to vector<64x1xf32>
    %22 = vector.broadcast %21 : vector<64x1xf32> to vector<64x256xf32>
    %23 = vector.shape_cast %18 : vector<64x1xf32> to vector<64x1xf32>
    %24 = vector.broadcast %23 : vector<64x1xf32> to vector<64x256xf32>
    %25 = arith.select %20, %22, %24 : vector<64x256xi1>, vector<64x256xf32>
    %cst_11 = arith.constant 7.812500e-03 : f32
    %26 = vector.broadcast %cst_11 : f32 to vector<64x256xf32>
    %27 = arith.mulf %25, %26 : vector<64x256xf32>
    %28 = arith.subf %9, %27 : vector<64x256xf32>
    %29 = arith.mulf %28, %28 : vector<64x256xf32>
    %cst_12 = arith.constant dense<0.000000e+00> : vector<64xf32>
    %30 = vector.multi_reduction <add>, %29, %cst_12 [1] : vector<64x256xf32> to vector<64xf32>
    %31 = vector.shape_cast %30 : vector<64xf32> to vector<64x1xf32>
    %cst_13 = arith.constant 0.000000e+00 : f32
    %32 = vector.shape_cast %6 : vector<1x256xi1> to vector<1x256xi1>
    %33 = vector.broadcast %32 : vector<1x256xi1> to vector<64x256xi1>
    %34 = vector.broadcast %cst_13 : f32 to vector<64x256xf32>
    %35 = arith.select %33, %29, %34 : vector<64x256xi1>, vector<64x256xf32>
    %cst_14 = arith.constant dense<0.000000e+00> : vector<64xf32>
    %36 = vector.multi_reduction <add>, %35, %cst_14 [1] : vector<64x256xf32> to vector<64xf32>
    %37 = vector.shape_cast %36 : vector<64xf32> to vector<64x1xf32>
    %38 = arith.subf %31, %37 : vector<64x1xf32>
    %39 = vector.shape_cast %6 : vector<1x256xi1> to vector<1x256xi1>
    %40 = vector.broadcast %39 : vector<1x256xi1> to vector<64x256xi1>
    %41 = vector.shape_cast %37 : vector<64x1xf32> to vector<64x1xf32>
    %42 = vector.broadcast %41 : vector<64x1xf32> to vector<64x256xf32>
    %43 = vector.shape_cast %38 : vector<64x1xf32> to vector<64x1xf32>
    %44 = vector.broadcast %43 : vector<64x1xf32> to vector<64x256xf32>
    %45 = arith.select %40, %42, %44 : vector<64x256xi1>, vector<64x256xf32>
    %cst_15 = arith.constant 7.812500e-03 : f32
    %46 = vector.broadcast %cst_15 : f32 to vector<64x256xf32>
    %47 = arith.mulf %45, %46 : vector<64x256xf32>
    %cst_16 = arith.constant 9.99999974E-6 : f32
    %48 = vector.broadcast %cst_16 : f32 to vector<64x256xf32>
    %49 = arith.addf %47, %48 : vector<64x256xf32>
    %50 = math.rsqrt %49 : vector<64x256xf32>
    %51 = arith.mulf %28, %50 : vector<64x256xf32>
    %52 = vector.broadcast %2 : vector<1x256xf32> to vector<64x256xf32>
    %53 = arith.mulf %51, %52 : vector<64x256xf32>
    %54 = vector.broadcast %3 : vector<1x256xf32> to vector<64x256xf32>
    %55 = arith.addf %53, %54 : vector<64x256xf32>
    %56 = vector.shape_cast %55 : vector<64x256xf32> to vector<8x1x8x256xf32>
    %c0_17 = arith.constant 0 : index
    %c0_18 = arith.constant 0 : index
    %c0_19 = arith.constant 0 : index
    %c0_20 = arith.constant 0 : index
    %57 = vector.load %arg5[%c0_17, %c0_18, %c0_19, %c0_20] : memref<8x2x8x256xf32, #tpu.memory_space<vmem>>, vector<8x1x8x256xf32>
    tpu.vector_store %arg5[%c0_17, %c0_18, %c0_19, %c0_20], %56 {strides = array<i32>} : memref<8x2x8x256xf32, #tpu.memory_space<vmem>>, vector<8x1x8x256xf32>,
    %c1 = arith.constant 1 : index
    %c0_21 = arith.constant 0 : index
    %c0_22 = arith.constant 0 : index
    %58 = vector.load %arg2[%c1, %c0_21, %c0_22] : memref<2x256x256xbf16, #tpu.memory_space<vmem>>, vector<1x256x256xbf16>
    %59 = vector.shape_cast %58 : vector<1x256x256xbf16> to vector<256x256xbf16>
    %cst_23 = arith.constant dense<0.000000e+00> : vector<64x256xf32>
    %60 = tpu.matmul %1, %59, %cst_23 {dimension_numbers = #tpu.dot_dimension_numbers<[1], [0], [0], [1], [0, 0, 1, 1], [], []>} : vector<64x256xbf16>, vector<256x256xbf16>, vector<64x256xf32> -> vector<64x256xf32>
    %cst_24 = arith.constant dense<0.000000e+00> : vector<64xf32>
    %61 = vector.multi_reduction <add>, %60, %cst_24 [1] : vector<64x256xf32> to vector<64xf32>
    %62 = vector.shape_cast %61 : vector<64xf32> to vector<64x1xf32>
    %cst_25 = arith.constant 0.000000e+00 : f32
    %63 = vector.shape_cast %6 : vector<1x256xi1> to vector<1x256xi1>
    %64 = vector.broadcast %63 : vector<1x256xi1> to vector<64x256xi1>
    %65 = vector.broadcast %cst_25 : f32 to vector<64x256xf32>
    %66 = arith.select %64, %60, %65 : vector<64x256xi1>, vector<64x256xf32>
    %cst_26 = arith.constant dense<0.000000e+00> : vector<64xf32>
    %67 = vector.multi_reduction <add>, %66, %cst_26 [1] : vector<64x256xf32> to vector<64xf32>
    %68 = vector.shape_cast %67 : vector<64xf32> to vector<64x1xf32>
    %69 = arith.subf %62, %68 : vector<64x1xf32>
    %70 = vector.shape_cast %6 : vector<1x256xi1> to vector<1x256xi1>
    %71 = vector.broadcast %70 : vector<1x256xi1> to vector<64x256xi1>
    %72 = vector.shape_cast %68 : vector<64x1xf32> to vector<64x1xf32>
    %73 = vector.broadcast %72 : vector<64x1xf32> to vector<64x256xf32>
    %74 = vector.shape_cast %69 : vector<64x1xf32> to vector<64x1xf32>
    %75 = vector.broadcast %74 : vector<64x1xf32> to vector<64x256xf32>
    %76 = arith.select %71, %73, %75 : vector<64x256xi1>, vector<64x256xf32>
    %cst_27 = arith.constant 7.812500e-03 : f32
    %77 = vector.broadcast %cst_27 : f32 to vector<64x256xf32>
    %78 = arith.mulf %76, %77 : vector<64x256xf32>
    %79 = arith.subf %60, %78 : vector<64x256xf32>
    %80 = arith.mulf %79, %79 : vector<64x256xf32>
    %cst_28 = arith.constant dense<0.000000e+00> : vector<64xf32>
    %81 = vector.multi_reduction <add>, %80, %cst_28 [1] : vector<64x256xf32> to vector<64xf32>
    %82 = vector.shape_cast %81 : vector<64xf32> to vector<64x1xf32>
    %cst_29 = arith.constant 0.000000e+00 : f32
    %83 = vector.shape_cast %6 : vector<1x256xi1> to vector<1x256xi1>
    %84 = vector.broadcast %83 : vector<1x256xi1> to vector<64x256xi1>
    %85 = vector.broadcast %cst_29 : f32 to vector<64x256xf32>
    %86 = arith.select %84, %80, %85 : vector<64x256xi1>, vector<64x256xf32>
    %cst_30 = arith.constant dense<0.000000e+00> : vector<64xf32>
    %87 = vector.multi_reduction <add>, %86, %cst_30 [1] : vector<64x256xf32> to vector<64xf32>
    %88 = vector.shape_cast %87 : vector<64xf32> to vector<64x1xf32>
    %89 = arith.subf %82, %88 : vector<64x1xf32>
    %90 = vector.shape_cast %6 : vector<1x256xi1> to vector<1x256xi1>
    %91 = vector.broadcast %90 : vector<1x256xi1> to vector<64x256xi1>
    %92 = vector.shape_cast %88 : vector<64x1xf32> to vector<64x1xf32>
    %93 = vector.broadcast %92 : vector<64x1xf32> to vector<64x256xf32>
    %94 = vector.shape_cast %89 : vector<64x1xf32> to vector<64x1xf32>
    %95 = vector.broadcast %94 : vector<64x1xf32> to vector<64x256xf32>
    %96 = arith.select %91, %93, %95 : vector<64x256xi1>, vector<64x256xf32>
    %cst_31 = arith.constant 7.812500e-03 : f32
    %97 = vector.broadcast %cst_31 : f32 to vector<64x256xf32>
    %98 = arith.mulf %96, %97 : vector<64x256xf32>
    %cst_32 = arith.constant 9.99999974E-6 : f32
    %99 = vector.broadcast %cst_32 : f32 to vector<64x256xf32>
    %100 = arith.addf %98, %99 : vector<64x256xf32>
    %101 = math.rsqrt %100 : vector<64x256xf32>
    %102 = arith.mulf %79, %101 : vector<64x256xf32>
    %103 = vector.broadcast %2 : vector<1x256xf32> to vector<64x256xf32>
    %104 = arith.mulf %102, %103 : vector<64x256xf32>
    %105 = vector.broadcast %3 : vector<1x256xf32> to vector<64x256xf32>
    %106 = arith.addf %104, %105 : vector<64x256xf32>
    %107 = vector.shape_cast %106 : vector<64x256xf32> to vector<8x1x8x256xf32>
    %c0_33 = arith.constant 0 : index
    %c1_34 = arith.constant 1 : index
    %c0_35 = arith.constant 0 : index
    %c0_36 = arith.constant 0 : index
    %108 = vector.load %arg5[%c0_33, %c1_34, %c0_35, %c0_36] : memref<8x2x8x256xf32, #tpu.memory_space<vmem>>, vector<8x1x8x256xf32>
    tpu.vector_store %arg5[%c0_33, %c1_34, %c0_35, %c0_36], %107 {strides = array<i32>} : memref<8x2x8x256xf32, #tpu.memory_space<vmem>>, vector<8x1x8x256xf32>,
    return
  }
  func.func @transform_0(%arg0: i32) -> (i32, i32) {
    %c0_i32 = arith.constant 0 : i32
    %c0_i32_0 = arith.constant 0 : i32
    return %arg0, %c0_i32 : i32, i32
  }
  func.func @transform_1(%arg0: i32) -> (i32, i32, i32) {
    %c0_i32 = arith.constant 0 : i32
    %c0_i32_0 = arith.constant 0 : i32
    %c0_i32_1 = arith.constant 0 : i32
    %c0_i32_2 = arith.constant 0 : i32
    return %c0_i32, %c0_i32_0, %c0_i32_1 : i32, i32, i32
  }
  func.func @transform_2(%arg0: i32) -> (i32, i32) {
    %c0_i32 = arith.constant 0 : i32
    %c0_i32_0 = arith.constant 0 : i32
    %c0_i32_1 = arith.constant 0 : i32
    return %c0_i32, %c0_i32_0 : i32, i32
  }
  func.func @transform_3(%arg0: i32) -> (i32, i32) {
    %c0_i32 = arith.constant 0 : i32
    %c0_i32_0 = arith.constant 0 : i32
    %c0_i32_1 = arith.constant 0 : i32
    return %c0_i32, %c0_i32_0 : i32, i32
  }
  func.func @transform_4(%arg0: i32) -> (i32, i32, i32, i32) {
    %c0_i32 = arith.constant 0 : i32
    %c0_i32_0 = arith.constant 0 : i32
    %c0_i32_1 = arith.constant 0 : i32
    %c0_i32_2 = arith.constant 0 : i32
    return %arg0, %c0_i32, %c0_i32_0, %c0_i32_1 : i32, i32, i32, i32
  }
}

</mosaic_0001>

<llo_original>
// kernel: patch_expand_forward.1
$region0: #{patch_expand_forward.1}
  #allocation0 [shape = 'u32[]', space=smem, size = 0x4, offset = 0x4, fixed_abs, tag = 'smem constant byte address 0x4 - core index']
  #allocation1 [shape = 'u32[144,128]{1,0:T(1,128)}', space=vmem, size = 0x12000, scoped, tag = 'internal scratch']
  %s0 = inlined_call_operand.hbm [shape: f32[128,256], index: 0, kind: input, shape index: {}]
  %s1 = inlined_call_operand.hbm [shape: bf16[2,256,256], index: 1, kind: input, shape index: {}]
  %s2 = inlined_call_operand.vmem [shape: f32[1,256], index: 2, kind: input, shape index: {}]
  %s3 = inlined_call_operand.hbm [shape: f32[1,256], index: 3, kind: input, shape index: {}]
  %s4 = inlined_call_operand.vmem [shape: f32[16,2,8,256], index: 4, kind: output, shape index: {}]
  %s5 = sld [smem:[#allocation0]]
  $region61: #{patch_expand_forward.1} parent=0
    _
  %s7 = ssub.s32 1, %s5
  %s8 = scalar_select 0, %s7, %s5
  $region1: #{patch_expand_forward.1} parent=0
    #allocation2 [shape = 'u8[131072]{0}', space=vmem, size = 0x20000, scoped, tag = 'input window, operand 0']
    #allocation3 [shape = 's32[2]{0}', space=sflag, size = 0x8, scoped, tag = 'scoped memory for patch_expand_forward.1']
    #allocation4 [shape = 'u8[262144]{0}', space=vmem, size = 0x40000, scoped, tag = 'input window, operand 1, single buffered']
    #allocation5 [shape = 's32[1]{0}', space=sflag, size = 0x4, scoped, tag = 'scoped memory for patch_expand_forward.1']
    #allocation6 [shape = 'u8[1024]{0}', space=vmem, size = 0x400, scoped, tag = 'input window, operand 3, single buffered']
    %9 = vsyncpa [#allocation3], 0
    %s10 = scalar_lea.sflag [#allocation3], 1
    %11 = vsyncpa %s10, 0
    %12 = vsyncpa [#allocation5], 0
    loop: start=0, step=1, limit=4
    $region2: #{patch_expand_forward.1} parent=1 // loop_pre_header
      _
    $region3: #{patch_expand_forward.1} parent=1 // loop_header
      %s14 = sphi 0, %s18
      %p15 = scmp.ge.s32.totalorder %s14, 4
      %s24 = sphi 0, %s26
      %s27 = sphi 0, %s24
      %s28 = sphi 0, %s27
      %s44 = sphi 0, %s28
      %s48 = sphi 0, %s48
      %s50 = sphi 0, %s48
      %s51 = sphi 0, %s50
      %s65 = sphi 0, %s51
      %s69 = sphi 0, %s69
      %s71 = sphi 0, %s69
      %s72 = sphi 0, %s71
      %s86 = sphi 0, %s72
      %s90 = sphi 0, %s90
      %s92 = sphi 0, %s90
      %s93 = sphi 0, %s92
      %s107 = sphi 0, %s93
      %s113 = sphi 0, %s115
      %s116 = sphi 0, %s113
      %s117 = sphi 0, %s116
      %s133 = sphi 0, %s117
    $region4: #{patch_expand_forward.1} parent=1 // loop_header_branch
      %17 = sbr.rel (%p15) target = $region8
    $region5: #{patch_expand_forward.1} parent=1 // loop_body
      %s19 = ssub.s32 %s14, 1
      %s20 = ssub.s32 %s14, 2
      %s21 = sadd.s32 %s14, 1
      %s22 = ssub.s32 %s14, %s21
      %p23 = scmp.eq.s32.totalorder %s22, 0
      %s25 = sadd.s32 %s24, 1
      %s26 = scalar_select %p23, %s24, %s25
      %p29 = pneg %p23
      %p30 = scmp.eq.s32.totalorder %s14, 1
      %p31 = por %p29, %p30
      %p32 = scmp.ne.s32.totalorder %s24, %s27
      %p33 = scmp.eq.s32.totalorder %s14, 0
      %p34 = por %p32, %p33
      %p35 = scmp.ne.s32.totalorder %s24, %s27
      %p36 = scmp.eq.s32.totalorder %s19, 1
      %p37 = por %p35, %p36
      %p38 = scmp.ne.s32.totalorder %s27, %s28
      %p39 = scmp.eq.s32.totalorder %s19, 0
      %p40 = por %p38, %p39
      %p41 = scmp.ne.s32.totalorder %s27, %s28
      %p42 = scmp.eq.s32.totalorder %s20, 1
      %p43 = por %p41, %p42
      %p45 = scmp.ne.s32.totalorder %s28, %s44
      %p46 = scmp.eq.s32.totalorder %s20, 0
      %p47 = por %p45, %p46
      %s49 = sadd.s32 %s48, 1
      %p52 = scmp.eq.s32.totalorder %s14, 1
      %p53 = scmp.ne.s32.totalorder %s48, %s50
      %p54 = scmp.eq.s32.totalorder %s14, 0
      %p55 = por %p53, %p54
      %p56 = scmp.ne.s32.totalorder %s48, %s50
      %p57 = scmp.eq.s32.totalorder %s19, 1
      %p58 = por %p56, %p57
      %p59 = scmp.ne.s32.totalorder %s50, %s51
      %p60 = scmp.eq.s32.totalorder %s19, 0
      %p61 = por %p59, %p60
      %p62 = scmp.ne.s32.totalorder %s50, %s51
      %p63 = scmp.eq.s32.totalorder %s20, 1
      %p64 = por %p62, %p63
      %p66 = scmp.ne.s32.totalorder %s51, %s65
      %p67 = scmp.eq.s32.totalorder %s20, 0
      %p68 = por %p66, %p67
      %s70 = sadd.s32 %s69, 1
      %p73 = scmp.eq.s32.totalorder %s14, 1
      %p74 = scmp.ne.s32.totalorder %s69, %s71
      %p75 = scmp.eq.s32.totalorder %s14, 0
      %p76 = por %p74, %p75
      %p77 = scmp.ne.s32.totalorder %s69, %s71
      %p78 = scmp.eq.s32.totalorder %s19, 1
      %p79 = por %p77, %p78
      %p80 = scmp.ne.s32.totalorder %s71, %s72
      %p81 = scmp.eq.s32.totalorder %s19, 0
      %p82 = por %p80, %p81
      %p83 = scmp.ne.s32.totalorder %s71, %s72
      %p84 = scmp.eq.s32.totalorder %s20, 1
      %p85 = por %p83, %p84
      %p87 = scmp.ne.s32.totalorder %s72, %s86
      %p88 = scmp.eq.s32.totalorder %s20, 0
      %p89 = por %p87, %p88
      %s91 = sadd.s32 %s90, 1
      %p94 = scmp.eq.s32.totalorder %s14, 1
      %p95 = scmp.ne.s32.totalorder %s90, %s92
      %p96 = scmp.eq.s32.totalorder %s14, 0
      %p97 = por %p95, %p96
      %p98 = scmp.ne.s32.totalorder %s90, %s92
      %p99 = scmp.eq.s32.totalorder %s19, 1
      %p100 = por %p98, %p99
      %p101 = scmp.ne.s32.totalorder %s92, %s93
      %p102 = scmp.eq.s32.totalorder %s19, 0
      %p103 = por %p101, %p102
      %p104 = scmp.ne.s32.totalorder %s92, %s93
      %p105 = scmp.eq.s32.totalorder %s20, 1
      %p106 = por %p104, %p105
      %p108 = scmp.ne.s32.totalorder %s93, %s107
      %p109 = scmp.eq.s32.totalorder %s20, 0
      %p110 = por %p108, %p109
      %s111 = ssub.s32 %s14, %s21
      %p112 = scmp.eq.s32.totalorder %s111, 0
      %s114 = sadd.s32 %s113, 1
      %s115 = scalar_select %p112, %s113, %s114
      %p118 = pneg %p112
      %p119 = scmp.eq.s32.totalorder %s14, 1
      %p120 = por %p118, %p119
      %p121 = scmp.ne.s32.totalorder %s113, %s116
      %p122 = scmp.eq.s32.totalorder %s14, 0
      %p123 = por %p121, %p122
      %p124 = scmp.ne.s32.totalorder %s113, %s116
      %p125 = scmp.eq.s32.totalorder %s19, 1
      %p126 = por %p124, %p125
      %p127 = scmp.ne.s32.totalorder %s116, %s117
      %p128 = scmp.eq.s32.totalorder %s19, 0
      %p129 = por %p127, %p128
      %p130 = scmp.ne.s32.totalorder %s116, %s117
      %p131 = scmp.eq.s32.totalorder %s20, 1
      %p132 = por %p130, %p131
      %p134 = scmp.ne.s32.totalorder %s117, %s133
      %p135 = scmp.eq.s32.totalorder %s20, 0
      %p136 = por %p134, %p135
      %p137 = scmp.le.s32.totalorder 1, %s14
      %p138 = scmp.lt.s32.totalorder %s14, 3
      %p139 = pnand %p137, %p138
      %p140 = pneg %p139
      // Predicated region
      $region9: #{patch_expand_forward.1} parent=5 // pred_check
        _
      $region10: #{patch_expand_forward.1} parent=5 // pred_check_branch
        %142 = sbr.rel (%p139) target = $region12
      $region11: #{patch_expand_forward.1} parent=5 // pred_region
        %s143 = ssub.s32 %s14, 1
        // Predicated region
        $region13: #{patch_expand_forward.1} parent=11 // pred_check
          %p144 = pneg %p61
        $region14: #{patch_expand_forward.1} parent=11 // pred_check_branch
          %146 = sbr.rel (%p144) target = $region16
        $region15: #{patch_expand_forward.1} parent=11 // pred_region
          %s148 = ssub.s32 8192, 8192
          %149 = vsyncadd [#allocation5], %s148
          %s150 = sshll.u32 [#allocation4], 4
          %s151 = int_to_ptr.vmem [resolvable:$true] %s150
          %156 = dma.hbm_to_vmem [thread:$0]  %s1, 8192, %s151, [#allocation5], 128, 128, 8
        $region16: #{patch_expand_forward.1} parent=11 // pred_fallthru
          _
        // Predicated region
        $region17: #{patch_expand_forward.1} parent=11 // pred_check
          %p157 = pneg %p82
        $region18: #{patch_expand_forward.1} parent=11 // pred_check_branch
          %159 = sbr.rel (%p157) target = $region20
        $region19: #{patch_expand_forward.1} parent=11 // pred_region
          _
        $region20: #{patch_expand_forward.1} parent=11 // pred_fallthru
          _
        // Predicated region
        $region21: #{patch_expand_forward.1} parent=11 // pred_check
          %p160 = pneg %p103
        $region22: #{patch_expand_forward.1} parent=11 // pred_check_branch
          %162 = sbr.rel (%p160) target = $region24
        $region23: #{patch_expand_forward.1} parent=11 // pred_region
          %s164 = ssub.s32 32, 32
          %165 = vsyncadd [#allocation5], %s164
          %s167 = sshll.u32 [#allocation6], 4
          %s168 = int_to_ptr.vmem [resolvable:$true] %s167
          %170 = dma.hbm_to_vmem [thread:$0]  %s3, 32, %s168, [#allocation5]
        $region24: #{patch_expand_forward.1} parent=11 // pred_fallthru
          _
      $region12: #{patch_expand_forward.1} parent=5 // pred_fallthru
        _
      %p171 = scmp.lt.s32.totalorder %s14, 2
      // Predicated region
      $region25: #{patch_expand_forward.1} parent=5 // pred_check
        %p172 = pneg %p171
      $region26: #{patch_expand_forward.1} parent=5 // pred_check_branch
        %174 = sbr.rel (%p172) target = $region28
      $region27: #{patch_expand_forward.1} parent=5 // pred_region
        // Predicated region
        $region29: #{patch_expand_forward.1} parent=27 // pred_check
          %p175 = pneg %p34
        $region30: #{patch_expand_forward.1} parent=27 // pred_check_branch
          %177 = sbr.rel (%p175) target = $region32
        $region31: #{patch_expand_forward.1} parent=27 // pred_region
          %s178 = sand.u32 %s24, 1
          %s179 = scalar_lea.sflag [#allocation3], %s178
          %s180 = sand.u32 %s24, 1
          %s181 = smul.addr %s180, 128
          %s182 = scalar_lea.vmem [#allocation2], %s181
          %s183 = smul.u32 8, %s14
          %s185 = ssub.s32 2048, 2048
          %186 = vsyncadd %s179, %s185
          %s187 = smul.addr %s183, 2
          %s188 = smul.addr %s187, 128
          %s189 = scalar_lea.hbm %s0, %s188
          %s190 = sshll.u32 %s182, 4
          %s191 = int_to_ptr.vmem [resolvable:$true] %s190
          %196 = dma.hbm_to_vmem [thread:$0]  %s189, 2048, %s191, %s179, 256, 256, 16
        $region32: #{patch_expand_forward.1} parent=27 // pred_fallthru
          _
      $region28: #{patch_expand_forward.1} parent=5 // pred_fallthru
        _
      %p197 = scmp.le.s32.totalorder 1, %s14
      %p198 = scmp.lt.s32.totalorder %s14, 3
      %p199 = pnand %p197, %p198
      %p200 = pneg %p199
      // Predicated region
      $region33: #{patch_expand_forward.1} parent=5 // pred_check
        _
      $region34: #{patch_expand_forward.1} parent=5 // pred_check_branch
        %202 = sbr.rel (%p199) target = $region36
      $region35: #{patch_expand_forward.1} parent=5 // pred_region
        %s203 = ssub.s32 %s14, 1
        %s204 = sand.u32 %s27, 1
        %s205 = scalar_lea.sflag [#allocation3], %s204
        %s206 = sand.u32 %s27, 1
        %s207 = smul.addr %s206, 128
        %s208 = scalar_lea.vmem [#allocation2], %s207
        // Predicated region
        $region37: #{patch_expand_forward.1} parent=35 // pred_check
          %p209 = pneg %p40
        $region38: #{patch_expand_forward.1} parent=35 // pred_check_branch
          %211 = sbr.rel (%p209) target = $region40
        $region39: #{patch_expand_forward.1} parent=35 // pred_region
          %212 = dma.done %s205, 2048
        $region40: #{patch_expand_forward.1} parent=35 // pred_fallthru
          _
        // Predicated region
        $region41: #{patch_expand_forward.1} parent=35 // pred_check
          %p213 = pneg %p61
        $region42: #{patch_expand_forward.1} parent=35 // pred_check_branch
          %215 = sbr.rel (%p213) target = $region44
        $region43: #{patch_expand_forward.1} parent=35 // pred_region
          %216 = dma.done [#allocation5], 8192
        $region44: #{patch_expand_forward.1} parent=35 // pred_fallthru
          _
        // Predicated region
        $region45: #{patch_expand_forward.1} parent=35 // pred_check
          %p217 = pneg %p103
        $region46: #{patch_expand_forward.1} parent=35 // pred_check_branch
          %219 = sbr.rel (%p217) target = $region48
        $region47: #{patch_expand_forward.1} parent=35 // pred_region
          %220 = dma.done [#allocation5], 32
        $region48: #{patch_expand_forward.1} parent=35 // pred_fallthru
          _
        %s221 = sand.u32 %s27, 1
        %s222 = scalar_lea.sflag [#allocation3], %s221
        %s223 = sand.u32 %s27, 1
        %s224 = smul.addr %s223, 128
        %s225 = scalar_lea.vmem [#allocation2], %s224
        %p226 = pneg %p40
        %p227 = pneg %p37
        %p228 = pneg %p61
        %p229 = pneg %p58
        %p230 = pneg %p82
        %p231 = pneg %p79
        %p232 = pneg %p103
        %p233 = pneg %p100
        %p234 = pneg %p129
        %p235 = pneg %p126
        %s236 = smul.u32 8, %s19
        %p237 = scmp.lt.s32.totalorder %s236, 15
        %s238 = scalar_select %p237, %s236, 15
        %s239 = smul.addr %s238, 4
        %s240 = smul.addr %s239, 8
        %s241 = scalar_lea.vmem %s4, %s240
        %s242 = smul.u32 8, %s19
        %s243 = smul.u32 8, %s19
        %p244 = scmp.lt.s32.totalorder %s243, 15
        %s245 = scalar_select %p244, %s243, 15
        %s246 = smul.addr %s245, 4
        %s247 = smul.addr %s246, 8
        %s248 = scalar_lea.vmem %s4, %s247
        %s249 = smul.u32 8, %s19
        %v250 = vld [vmem:[%s208] sm:$0xff]
        %v251 = vld [vmem:[%s208 + $0x8] sm:$0xff]
        %v252 = vld [vmem:[%s208 + $0x10] sm:$0xff]
        %v253 = vld [vmem:[%s208 + $0x18] sm:$0xff]
        %v254 = vld [vmem:[%s208 + $0x20] sm:$0xff]
        %v255 = vld [vmem:[%s208 + $0x28] sm:$0xff]
        %v256 = vld [vmem:[%s208 + $0x30] sm:$0xff]
        %v257 = vld [vmem:[%s208 + $0x38] sm:$0xff]
        %v258 = vld [vmem:[%s208 + $0x40] sm:$0xff]
        %v259 = vld [vmem:[%s208 + $0x48] sm:$0xff]
        %v260 = vld [vmem:[%s208 + $0x50] sm:$0xff]
        %v261 = vld [vmem:[%s208 + $0x58] sm:$0xff]
        %v262 = vld [vmem:[%s208 + $0x60] sm:$0xff]
        %v263 = vld [vmem:[%s208 + $0x68] sm:$0xff]
        %v264 = vld [vmem:[%s208 + $0x70] sm:$0xff]
        %v265 = vld [vmem:[%s208 + $0x78] sm:$0xff]
        %v266 = vpack.c.bf16 %v252, %v250
        %v267 = vpack.c.bf16 %v253, %v251
        %v268 = vpack.c.bf16 %v256, %v254
        %v269 = vpack.c.bf16 %v257, %v255
        %v270 = vpack.c.bf16 %v260, %v258
        %v271 = vpack.c.bf16 %v261, %v259
        %v272 = vpack.c.bf16 %v264, %v262
        %v273 = vpack.c.bf16 %v265, %v263
        %v274 = vld [vmem:[%s2] sm:$0x3]
        %v275 = vld [vmem:[#allocation6] sm:$0x3]
        %v276 = vlaneseq
        %v277 = vand.u32 %v276, 127
        %v278 = vadd.s32 %v277, 128
        %vm279 = vcmp.lt.s32.totalorder %v277, 128
        %vm280 = vcmp.lt.s32.totalorder %v278, 128
        %v281 = vld [vmem:[#allocation4] sm:$0xff]
        %v282 = vld [vmem:[#allocation4 + $0x8] sm:$0xff]
        %v283 = vld [vmem:[#allocation4 + $0x10] sm:$0xff]
        %v284 = vld [vmem:[#allocation4 + $0x18] sm:$0xff]
        %v285 = vld [vmem:[#allocation4 + $0x20] sm:$0xff]
        %v286 = vld [vmem:[#allocation4 + $0x28] sm:$0xff]
        %v287 = vld [vmem:[#allocation4 + $0x30] sm:$0xff]
        %v288 = vld [vmem:[#allocation4 + $0x38] sm:$0xff]
        %v289 = vld [vmem:[#allocation4 + $0x40] sm:$0xff]
        %v290 = vld [vmem:[#allocation4 + $0x48] sm:$0xff]
        %v291 = vld [vmem:[#allocation4 + $0x50] sm:$0xff]
        %v292 = vld [vmem:[#allocation4 + $0x58] sm:$0xff]
        %v293 = vld [vmem:[#allocation4 + $0x60] sm:$0xff]
        %v294 = vld [vmem:[#allocation4 + $0x68] sm:$0xff]
        %v295 = vld [vmem:[#allocation4 + $0x70] sm:$0xff]
        %v296 = vld [vmem:[#allocation4 + $0x78] sm:$0xff]
        %v297 = vld [vmem:[#allocation4 + $0x80] sm:$0xff]
        %v298 = vld [vmem:[#allocation4 + $0x88] sm:$0xff]
        %v299 = vld [vmem:[#allocation4 + $0x90] sm:$0xff]
        %v300 = vld [vmem:[#allocation4 + $0x98] sm:$0xff]
        %v301 = vld [vmem:[#allocation4 + $0xa0] sm:$0xff]
        %v302 = vld [vmem:[#allocation4 + $0xa8] sm:$0xff]
        %v303 = vld [vmem:[#allocation4 + $0xb0] sm:$0xff]
        %v304 = vld [vmem:[#allocation4 + $0xb8] sm:$0xff]
        %v305 = vld [vmem:[#allocation4 + $0xc0] sm:$0xff]
        %v306 = vld [vmem:[#allocation4 + $0xc8] sm:$0xff]
        %v307 = vld [vmem:[#allocation4 + $0xd0] sm:$0xff]
        %v308 = vld [vmem:[#allocation4 + $0xd8] sm:$0xff]
        %v309 = vld [vmem:[#allocation4 + $0xe0] sm:$0xff]
        %v310 = vld [vmem:[#allocation4 + $0xe8] sm:$0xff]
        %v311 = vld [vmem:[#allocation4 + $0xf0] sm:$0xff]
        %v312 = vld [vmem:[#allocation4 + $0xf8] sm:$0xff]
        %v345 = vunpack.c.l.b16 %v281
        %v346 = vunpack.c.h.b16 %v281
        %v347 = vunpack.c.l.b16 %v282
        %v348 = vunpack.c.h.b16 %v282
        %v349 = vunpack.c.l.b16 %v283
        %v350 = vunpack.c.h.b16 %v283
        %v351 = vunpack.c.l.b16 %v284
        %v352 = vunpack.c.h.b16 %v284
        %v353 = vunpack.c.l.b16 %v285
        %v354 = vunpack.c.h.b16 %v285
        %v355 = vunpack.c.l.b16 %v286
        %v356 = vunpack.c.h.b16 %v286
        %v357 = vunpack.c.l.b16 %v287
        %v358 = vunpack.c.h.b16 %v287
        %v359 = vunpack.c.l.b16 %v288
        %v360 = vunpack.c.h.b16 %v288
        %v361 = vunpack.c.l.b16 %v289
        %v362 = vunpack.c.h.b16 %v289
        %v363 = vunpack.c.l.b16 %v290
        %v364 = vunpack.c.h.b16 %v290
        %v365 = vunpack.c.l.b16 %v291
        %v366 = vunpack.c.h.b16 %v291
        %v367 = vunpack.c.l.b16 %v292
        %v368 = vunpack.c.h.b16 %v292
        %v369 = vunpack.c.l.b16 %v293
        %v370 = vunpack.c.h.b16 %v293
        %v371 = vunpack.c.l.b16 %v294
        %v372 = vunpack.c.h.b16 %v294
        %v373 = vunpack.c.l.b16 %v295
        %v374 = vunpack.c.h.b16 %v295
        %v375 = vunpack.c.l.b16 %v296
        %v376 = vunpack.c.h.b16 %v296
        %v377 = vunpack.c.l.b16 %v297
        %v378 = vunpack.c.h.b16 %v297
        %v379 = vunpack.c.l.b16 %v298
        %v380 = vunpack.c.h.b16 %v298
        %v381 = vunpack.c.l.b16 %v299
        %v382 = vunpack.c.h.b16 %v299
        %v383 = vunpack.c.l.b16 %v300
        %v384 = vunpack.c.h.b16 %v300
        %v385 = vunpack.c.l.b16 %v301
        %v386 = vunpack.c.h.b16 %v301
        %v387 = vunpack.c.l.b16 %v302
        %v388 = vunpack.c.h.b16 %v302
        %v389 = vunpack.c.l.b16 %v303
        %v390 = vunpack.c.h.b16 %v303
        %v391 = vunpack.c.l.b16 %v304
        %v392 = vunpack.c.h.b16 %v304
        %v393 = vunpack.c.l.b16 %v305
        %v394 = vunpack.c.h.b16 %v305
        %v395 = vunpack.c.l.b16 %v306
        %v396 = vunpack.c.h.b16 %v306
        %v397 = vunpack.c.l.b16 %v307
        %v398 = vunpack.c.h.b16 %v307
        %v399 = vunpack.c.l.b16 %v308
        %v400 = vunpack.c.h.b16 %v308
        %v401 = vunpack.c.l.b16 %v309
        %v402 = vunpack.c.h.b16 %v309
        %v403 = vunpack.c.l.b16 %v310
        %v404 = vunpack.c.h.b16 %v310
        %v405 = vunpack.c.l.b16 %v311
        %v406 = vunpack.c.h.b16 %v311
        %v407 = vunpack.c.l.b16 %v312
        %v408 = vunpack.c.h.b16 %v312
        %v409 = vpack.c.b16 %v347, %v345
        %v410 = vpack.c.b16 %v348, %v346
        %v411 = vpack.c.b16 %v351, %v349
        %v412 = vpack.c.b16 %v352, %v350
        %v413 = vpack.c.b16 %v355, %v353
        %v414 = vpack.c.b16 %v356, %v354
        %v415 = vpack.c.b16 %v359, %v357
        %v416 = vpack.c.b16 %v360, %v358
        %v417 = vpack.c.b16 %v363, %v361
        %v418 = vpack.c.b16 %v364, %v362
        %v419 = vpack.c.b16 %v367, %v365
        %v420 = vpack.c.b16 %v368, %v366
        %v421 = vpack.c.b16 %v371, %v369
        %v422 = vpack.c.b16 %v372, %v370
        %v423 = vpack.c.b16 %v375, %v373
        %v424 = vpack.c.b16 %v376, %v374
        %v425 = vpack.c.b16 %v379, %v377
        %v426 = vpack.c.b16 %v380, %v378
        %v427 = vpack.c.b16 %v383, %v381
        %v428 = vpack.c.b16 %v384, %v382
        %v429 = vpack.c.b16 %v387, %v385
        %v430 = vpack.c.b16 %v388, %v386
        %v431 = vpack.c.b16 %v391, %v389
        %v432 = vpack.c.b16 %v392, %v390
        %v433 = vpack.c.b16 %v395, %v393
        %v434 = vpack.c.b16 %v396, %v394
        %v435 = vpack.c.b16 %v399, %v397
        %v436 = vpack.c.b16 %v400, %v398
        %v437 = vpack.c.b16 %v403, %v401
        %v438 = vpack.c.b16 %v404, %v402
        %v439 = vpack.c.b16 %v407, %v405
        %v440 = vpack.c.b16 %v408, %v406
        %473 = vmatprep.subr.bf16.mxu0 %v424
        %474 = vmatpush1.bf16.msra.mxu0 %v423
        %475 = vmatprep.subr.bf16.mxu0 %v422
        %476 = vmatpush1.bf16.msra.mxu0 %v421
        %477 = vmatprep.subr.bf16.mxu0 %v420
        %478 = vmatpush1.bf16.msra.mxu0 %v419
        %479 = vmatprep.subr.bf16.mxu0 %v418
        %480 = vmatpush1.bf16.msra.mxu0 %v417
        %481 = vmatprep.subr.bf16.mxu0 %v416
        %482 = vmatpush1.bf16.msra.mxu0 %v415
        %483 = vmatprep.subr.bf16.mxu0 %v414
        %484 = vmatpush1.bf16.msra.mxu0 %v413
        %485 = vmatprep.subr.bf16.mxu0 %v412
        %486 = vmatpush1.bf16.msra.mxu0 %v411
        %487 = vmatprep.subr.bf16.mxu0 %v410
        %488 = vmatpush1.bf16.msra.mxu0 %v409
        %489 = vmatprep.subr.bf16.mxu0 %v440
        %490 = vmatpush2.bf16.msra.mxu0 %v439
        %491 = vmatprep.subr.bf16.mxu0 %v438
        %492 = vmatpush2.bf16.msra.mxu0 %v437
        %493 = vmatprep.subr.bf16.mxu0 %v436
        %494 = vmatpush2.bf16.msra.mxu0 %v435
        %495 = vmatprep.subr.bf16.mxu0 %v434
        %496 = vmatpush2.bf16.msra.mxu0 %v433
        %497 = vmatprep.subr.bf16.mxu0 %v432
        %498 = vmatpush2.bf16.msra.mxu0 %v431
        %499 = vmatprep.subr.bf16.mxu0 %v430
        %500 = vmatpush2.bf16.msra.mxu0 %v429
        %501 = vmatprep.subr.bf16.mxu0 %v428
        %502 = vmatpush2.bf16.msra.mxu0 %v427
        %503 = vmatprep.subr.bf16.mxu0 %v426
        %504 = vmatpush2.bf16.msra.mxu0 %v425
        %505 = vmatprep.mubr.bf16.mxu0 %v267
        %506 = vmatmul.mubr.bf16.gmra.mxu0 %v266
        %v507 = vpop.f32.mrf.mxu0
        %v508 = vadd.f32 0.0, %v507
        %v509 = vpop.f32.mrf.mxu0
        %v510 = vadd.f32 0.0, %v509
        %v511 = vpop.f32.mrf.mxu0
        %v512 = vadd.f32 0.0, %v511
        %v513 = vpop.f32.mrf.mxu0
        %v514 = vadd.f32 0.0, %v513
        %515 = vmatprep.mubr.bf16.mxu0 %v269
        %516 = vmatmul.mubr.bf16.gmra.mxu0 %v268
        %v517 = vpop.f32.mrf.mxu0
        %v518 = vadd.f32 0.0, %v517
        %v519 = vpop.f32.mrf.mxu0
        %v520 = vadd.f32 0.0, %v519
        %v521 = vpop.f32.mrf.mxu0
        %v522 = vadd.f32 0.0, %v521
        %v523 = vpop.f32.mrf.mxu0
        %v524 = vadd.f32 0.0, %v523
        %525 = vmatprep.mubr.bf16.mxu0 %v271
        %526 = vmatmul.mubr.bf16.gmra.mxu0 %v270
        %v527 = vpop.f32.mrf.mxu0
        %v528 = vadd.f32 0.0, %v527
        %v529 = vpop.f32.mrf.mxu0
        %v530 = vadd.f32 0.0, %v529
        %v531 = vpop.f32.mrf.mxu0
        %v532 = vadd.f32 0.0, %v531
        %v533 = vpop.f32.mrf.mxu0
        %v534 = vadd.f32 0.0, %v533
        %535 = vmatprep.mubr.bf16.mxu0 %v273
        %536 = vmatmul.mubr.bf16.gmra.mxu0 %v272
        %v537 = vpop.f32.mrf.mxu0
        %v538 = vadd.f32 0.0, %v537
        %v539 = vpop.f32.mrf.mxu0
        %v540 = vadd.f32 0.0, %v539
        %v541 = vpop.f32.mrf.mxu0
        %v542 = vadd.f32 0.0, %v541
        %v543 = vpop.f32.mrf.mxu0
        %v544 = vadd.f32 0.0, %v543
        %545 = vdwg.mxu0
        %v546 = vadd.f32 %v508, %v510
        %547 = vadd.xlane.f32.xlu0 %v546
        %v548 = vpop.xlane.xlu0 %547
        %v549 = vadd.f32 %v512, %v514
        %550 = vadd.xlane.f32.xlu0 %v549
        %v551 = vpop.xlane.xlu0 %550
        %v552 = vadd.f32 %v518, %v520
        %553 = vadd.xlane.f32.xlu0 %v552
        %v554 = vpop.xlane.xlu0 %553
        %v555 = vadd.f32 %v522, %v524
        %556 = vadd.xlane.f32.xlu0 %v555
        %v557 = vpop.xlane.xlu0 %556
        %v558 = vadd.f32 %v528, %v530
        %559 = vadd.xlane.f32.xlu0 %v558
        %v560 = vpop.xlane.xlu0 %559
        %v561 = vadd.f32 %v532, %v534
        %562 = vadd.xlane.f32.xlu0 %v561
        %v563 = vpop.xlane.xlu0 %562
        %v564 = vadd.f32 %v538, %v540
        %565 = vadd.xlane.f32.xlu0 %v564
        %v566 = vpop.xlane.xlu0 %565
        %v567 = vadd.f32 %v542, %v544
        %568 = vadd.xlane.f32.xlu0 %v567
        %v569 = vpop.xlane.xlu0 %568
        %v570 = vsel %vm279, 1, 0
        %v571 = vsel %vm280, 1, 0
        %vm572 = vcmp.eq.s32.totalorder %v570, 1
        %vm573 = vcmp.eq.s32.totalorder %v571, 1
        %v574 = vsel %vm572, %v508, 0.0
        %v575 = vsel %vm573, %v510, 0.0
        %v576 = vsel %vm572, %v512, 0.0
        %v577 = vsel %vm573, %v514, 0.0
        %v578 = vsel %vm572, %v518, 0.0
        %v579 = vsel %vm573, %v520, 0.0
        %v580 = vsel %vm572, %v522, 0.0
        %v581 = vsel %vm573, %v524, 0.0
        %v582 = vsel %vm572, %v528, 0.0
        %v583 = vsel %vm573, %v530, 0.0
        %v584 = vsel %vm572, %v532, 0.0
        %v585 = vsel %vm573, %v534, 0.0
        %v586 = vsel %vm572, %v538, 0.0
        %v587 = vsel %vm573, %v540, 0.0
        %v588 = vsel %vm572, %v542, 0.0
        %v589 = vsel %vm573, %v544, 0.0
        %v590 = vadd.f32 %v574, %v575
        %591 = vadd.xlane.f32.xlu0 %v590
        %v592 = vpop.xlane.xlu0 %591
        %v593 = vadd.f32 %v576, %v577
        %594 = vadd.xlane.f32.xlu0 %v593
        %v595 = vpop.xlane.xlu0 %594
        %v596 = vadd.f32 %v578, %v579
        %597 = vadd.xlane.f32.xlu0 %v596
        %v598 = vpop.xlane.xlu0 %597
        %v599 = vadd.f32 %v580, %v581
        %600 = vadd.xlane.f32.xlu0 %v599
        %v601 = vpop.xlane.xlu0 %600
        %v602 = vadd.f32 %v582, %v583
        %603 = vadd.xlane.f32.xlu0 %v602
        %v604 = vpop.xlane.xlu0 %603
        %v605 = vadd.f32 %v584, %v585
        %606 = vadd.xlane.f32.xlu0 %v605
        %v607 = vpop.xlane.xlu0 %606
        %v608 = vadd.f32 %v586, %v587
        %609 = vadd.xlane.f32.xlu0 %v608
        %v610 = vpop.xlane.xlu0 %609
        %v611 = vadd.f32 %v588, %v589
        %612 = vadd.xlane.f32.xlu0 %v611
        %v613 = vpop.xlane.xlu0 %612
        %v614 = vsub.f32 %v548, %v592
        %v615 = vsub.f32 %v551, %v595
        %v616 = vsub.f32 %v554, %v598
        %v617 = vsub.f32 %v557, %v601
        %v618 = vsub.f32 %v560, %v604
        %v619 = vsub.f32 %v563, %v607
        %v620 = vsub.f32 %v566, %v610
        %v621 = vsub.f32 %v569, %v613
        %v622 = vsel %vm572, %v592, %v614
        %v623 = vsel %vm573, %v592, %v614
        %v624 = vsel %vm572, %v595, %v615
        %v625 = vsel %vm573, %v595, %v615
        %v626 = vsel %vm572, %v598, %v616
        %v627 = vsel %vm573, %v598, %v616
        %v628 = vsel %vm572, %v601, %v617
        %v629 = vsel %vm573, %v601, %v617
        %v630 = vsel %vm572, %v604, %v618
        %v631 = vsel %vm573, %v604, %v618
        %v632 = vsel %vm572, %v607, %v619
        %v633 = vsel %vm573, %v607, %v619
        %v634 = vsel %vm572, %v610, %v620
        %v635 = vsel %vm573, %v610, %v620
        %v636 = vsel %vm572, %v613, %v621
        %v637 = vsel %vm573, %v613, %v621
        %v638 = vmul.f32 %v622, 0.0078125
        %v639 = vmul.f32 %v623, 0.0078125
        %v640 = vmul.f32 %v624, 0.0078125
        %v641 = vmul.f32 %v625, 0.0078125
        %v642 = vmul.f32 %v626, 0.0078125
        %v643 = vmul.f32 %v627, 0.0078125
        %v644 = vmul.f32 %v628, 0.0078125
        %v645 = vmul.f32 %v629, 0.0078125
        %v646 = vmul.f32 %v630, 0.0078125
        %v647 = vmul.f32 %v631, 0.0078125
        %v648 = vmul.f32 %v632, 0.0078125
        %v649 = vmul.f32 %v633, 0.0078125
        %v650 = vmul.f32 %v634, 0.0078125
        %v651 = vmul.f32 %v635, 0.0078125
        %v652 = vmul.f32 %v636, 0.0078125
        %v653 = vmul.f32 %v637, 0.0078125
        %v654 = vsub.f32 %v508, %v638
        %v655 = vsub.f32 %v510, %v639
        %v656 = vsub.f32 %v512, %v640
        %v657 = vsub.f32 %v514, %v641
        %v658 = vsub.f32 %v518, %v642
        %v659 = vsub.f32 %v520, %v643
        %v660 = vsub.f32 %v522, %v644
        %v661 = vsub.f32 %v524, %v645
        %v662 = vsub.f32 %v528, %v646
        %v663 = vsub.f32 %v530, %v647
        %v664 = vsub.f32 %v532, %v648
        %v665 = vsub.f32 %v534, %v649
        %v666 = vsub.f32 %v538, %v650
        %v667 = vsub.f32 %v540, %v651
        %v668 = vsub.f32 %v542, %v652
        %v669 = vsub.f32 %v544, %v653
        %v670 = vmul.f32 %v654, %v654
        %v671 = vmul.f32 %v655, %v655
        %v672 = vmul.f32 %v656, %v656
        %v673 = vmul.f32 %v657, %v657
        %v674 = vmul.f32 %v658, %v658
        %v675 = vmul.f32 %v659, %v659
        %v676 = vmul.f32 %v660, %v660
        %v677 = vmul.f32 %v661, %v661
        %v678 = vmul.f32 %v662, %v662
        %v679 = vmul.f32 %v663, %v663
        %v680 = vmul.f32 %v664, %v664
        %v681 = vmul.f32 %v665, %v665
        %v682 = vmul.f32 %v666, %v666
        %v683 = vmul.f32 %v667, %v667
        %v684 = vmul.f32 %v668, %v668
        %v685 = vmul.f32 %v669, %v669
        %v686 = vadd.f32 %v670, %v671
        %687 = vadd.xlane.f32.xlu0 %v686
        %v688 = vpop.xlane.xlu0 %687
        %v689 = vadd.f32 %v672, %v673
        %690 = vadd.xlane.f32.xlu0 %v689
        %v691 = vpop.xlane.xlu0 %690
        %v692 = vadd.f32 %v674, %v675
        %693 = vadd.xlane.f32.xlu0 %v692
        %v694 = vpop.xlane.xlu0 %693
        %v695 = vadd.f32 %v676, %v677
        %696 = vadd.xlane.f32.xlu0 %v695
        %v697 = vpop.xlane.xlu0 %696
        %v698 = vadd.f32 %v678, %v679
        %699 = vadd.xlane.f32.xlu0 %v698
        %v700 = vpop.xlane.xlu0 %699
        %v701 = vadd.f32 %v680, %v681
        %702 = vadd.xlane.f32.xlu0 %v701
        %v703 = vpop.xlane.xlu0 %702
        %v704 = vadd.f32 %v682, %v683
        %705 = vadd.xlane.f32.xlu0 %v704
        %v706 = vpop.xlane.xlu0 %705
        %v707 = vadd.f32 %v684, %v685
        %708 = vadd.xlane.f32.xlu0 %v707
        %v709 = vpop.xlane.xlu0 %708
        %v710 = vsel %vm572, %v670, 0.0
        %v711 = vsel %vm573, %v671, 0.0
        %v712 = vsel %vm572, %v672, 0.0
        %v713 = vsel %vm573, %v673, 0.0
        %v714 = vsel %vm572, %v674, 0.0
        %v715 = vsel %vm573, %v675, 0.0
        %v716 = vsel %vm572, %v676, 0.0
        %v717 = vsel %vm573, %v677, 0.0
        %v718 = vsel %vm572, %v678, 0.0
        %v719 = vsel %vm573, %v679, 0.0
        %v720 = vsel %vm572, %v680, 0.0
        %v721 = vsel %vm573, %v681, 0.0
        %v722 = vsel %vm572, %v682, 0.0
        %v723 = vsel %vm573, %v683, 0.0
        %v724 = vsel %vm572, %v684, 0.0
        %v725 = vsel %vm573, %v685, 0.0
        %v726 = vadd.f32 %v710, %v711
        %727 = vadd.xlane.f32.xlu0 %v726
        %v728 = vpop.xlane.xlu0 %727
        %v729 = vadd.f32 %v712, %v713
        %730 = vadd.xlane.f32.xlu0 %v729
        %v731 = vpop.xlane.xlu0 %730
        %v732 = vadd.f32 %v714, %v715
        %733 = vadd.xlane.f32.xlu0 %v732
        %v734 = vpop.xlane.xlu0 %733
        %v735 = vadd.f32 %v716, %v717
        %736 = vadd.xlane.f32.xlu0 %v735
        %v737 = vpop.xlane.xlu0 %736
        %v738 = vadd.f32 %v718, %v719
        %739 = vadd.xlane.f32.xlu0 %v738
        %v740 = vpop.xlane.xlu0 %739
        %v741 = vadd.f32 %v720, %v721
        %742 = vadd.xlane.f32.xlu0 %v741
        %v743 = vpop.xlane.xlu0 %742
        %v744 = vadd.f32 %v722, %v723
        %745 = vadd.xlane.f32.xlu0 %v744
        %v746 = vpop.xlane.xlu0 %745
        %v747 = vadd.f32 %v724, %v725
        %748 = vadd.xlane.f32.xlu0 %v747
        %v749 = vpop.xlane.xlu0 %748
        %v750 = vsub.f32 %v688, %v728
        %v751 = vsub.f32 %v691, %v731
        %v752 = vsub.f32 %v694, %v734
        %v753 = vsub.f32 %v697, %v737
        %v754 = vsub.f32 %v700, %v740
        %v755 = vsub.f32 %v703, %v743
        %v756 = vsub.f32 %v706, %v746
        %v757 = vsub.f32 %v709, %v749
        %v758 = vsel %vm572, %v728, %v750
        %v759 = vsel %vm573, %v728, %v750
        %v760 = vsel %vm572, %v731, %v751
        %v761 = vsel %vm573, %v731, %v751
        %v762 = vsel %vm572, %v734, %v752
        %v763 = vsel %vm573, %v734, %v752
        %v764 = vsel %vm572, %v737, %v753
        %v765 = vsel %vm573, %v737, %v753
        %v766 = vsel %vm572, %v740, %v754
        %v767 = vsel %vm573, %v740, %v754
        %v768 = vsel %vm572, %v743, %v755
        %v769 = vsel %vm573, %v743, %v755
        %v770 = vsel %vm572, %v746, %v756
        %v771 = vsel %vm573, %v746, %v756
        %v772 = vsel %vm572, %v749, %v757
        %v773 = vsel %vm573, %v749, %v757
        %v774 = vmul.f32 %v758, 0.0078125
        %v775 = vmul.f32 %v759, 0.0078125
        %v776 = vmul.f32 %v760, 0.0078125
        %v777 = vmul.f32 %v761, 0.0078125
        %v778 = vmul.f32 %v762, 0.0078125
        %v779 = vmul.f32 %v763, 0.0078125
        %v780 = vmul.f32 %v764, 0.0078125
        %v781 = vmul.f32 %v765, 0.0078125
        %v782 = vmul.f32 %v766, 0.0078125
        %v783 = vmul.f32 %v767, 0.0078125
        %v784 = vmul.f32 %v768, 0.0078125
        %v785 = vmul.f32 %v769, 0.0078125
        %v786 = vmul.f32 %v770, 0.0078125
        %v787 = vmul.f32 %v771, 0.0078125
        %v788 = vmul.f32 %v772, 0.0078125
        %v789 = vmul.f32 %v773, 0.0078125
        %v790 = vadd.f32 %v774, 1e-05
        %v791 = vadd.f32 %v775, 1e-05
        %v792 = vadd.f32 %v776, 1e-05
        %v793 = vadd.f32 %v777, 1e-05
        %v794 = vadd.f32 %v778, 1e-05
        %v795 = vadd.f32 %v779, 1e-05
        %v796 = vadd.f32 %v780, 1e-05
        %v797 = vadd.f32 %v781, 1e-05
        %v798 = vadd.f32 %v782, 1e-05
        %v799 = vadd.f32 %v783, 1e-05
        %v800 = vadd.f32 %v784, 1e-05
        %v801 = vadd.f32 %v785, 1e-05
        %v802 = vadd.f32 %v786, 1e-05
        %v803 = vadd.f32 %v787, 1e-05
        %v804 = vadd.f32 %v788, 1e-05
        %v805 = vadd.f32 %v789, 1e-05
        %v806 = vrsqrt.pop %v790
        %v807 = vrsqrt.pop %v791
        %v808 = vrsqrt.pop %v792
        %v809 = vrsqrt.pop %v793
        %v810 = vrsqrt.pop %v794
        %v811 = vrsqrt.pop %v795
        %v812 = vrsqrt.pop %v796
        %v813 = vrsqrt.pop %v797
        %v814 = vrsqrt.pop %v798
        %v815 = vrsqrt.pop %v799
        %v816 = vrsqrt.pop %v800
        %v817 = vrsqrt.pop %v801
        %v818 = vrsqrt.pop %v802
        %v819 = vrsqrt.pop %v803
        %v820 = vrsqrt.pop %v804
        %v821 = vrsqrt.pop %v805
        %v822 = vmul.f32 %v654, %v806
        %v823 = vmul.f32 %v655, %v807
        %v824 = vmul.f32 %v656, %v808
        %v825 = vmul.f32 %v657, %v809
        %v826 = vmul.f32 %v658, %v810
        %v827 = vmul.f32 %v659, %v811
        %v828 = vmul.f32 %v660, %v812
        %v829 = vmul.f32 %v661, %v813
        %v830 = vmul.f32 %v662, %v814
        %v831 = vmul.f32 %v663, %v815
        %v832 = vmul.f32 %v664, %v816
        %v833 = vmul.f32 %v665, %v817
        %v834 = vmul.f32 %v666, %v818
        %v835 = vmul.f32 %v667, %v819
        %v836 = vmul.f32 %v668, %v820
        %v837 = vmul.f32 %v669, %v821
        %v839 = vlaneseq
        %v840 = vshrl.u32 %v839, 7
        %v841 = vsub.s32 0, %v840
        %v842 = vrot.slane %v274, %v841
        %v843 = vlaneseq
        %v844 = vshrl.u32 %v843, 7
        %v845 = vsub.s32 1, %v844
        %v846 = vrot.slane %v274, %v845
        %v849 = vmul.f32 %v822, %v842
        %v850 = vmul.f32 %v823, %v846
        %v851 = vmul.f32 %v824, %v842
        %v852 = vmul.f32 %v825, %v846
        %v853 = vmul.f32 %v826, %v842
        %v854 = vmul.f32 %v827, %v846
        %v855 = vmul.f32 %v828, %v842
        %v856 = vmul.f32 %v829, %v846
        %v857 = vmul.f32 %v830, %v842
        %v858 = vmul.f32 %v831, %v846
        %v859 = vmul.f32 %v832, %v842
        %v860 = vmul.f32 %v833, %v846
        %v861 = vmul.f32 %v834, %v842
        %v862 = vmul.f32 %v835, %v846
        %v863 = vmul.f32 %v836, %v842
        %v864 = vmul.f32 %v837, %v846
        %v866 = vlaneseq
        %v867 = vshrl.u32 %v866, 7
        %v868 = vsub.s32 0, %v867
        %v869 = vrot.slane %v275, %v868
        %v870 = vlaneseq
        %v871 = vshrl.u32 %v870, 7
        %v872 = vsub.s32 1, %v871
        %v873 = vrot.slane %v275, %v872
        %v876 = vadd.f32 %v849, %v869
        %v877 = vadd.f32 %v850, %v873
        %v878 = vadd.f32 %v851, %v869
        %v879 = vadd.f32 %v852, %v873
        %v880 = vadd.f32 %v853, %v869
        %v881 = vadd.f32 %v854, %v873
        %v882 = vadd.f32 %v855, %v869
        %v883 = vadd.f32 %v856, %v873
        %v884 = vadd.f32 %v857, %v869
        %v885 = vadd.f32 %v858, %v873
        %v886 = vadd.f32 %v859, %v869
        %v887 = vadd.f32 %v860, %v873
        %v888 = vadd.f32 %v861, %v869
        %v889 = vadd.f32 %v862, %v873
        %v890 = vadd.f32 %v863, %v869
        %v891 = vadd.f32 %v864, %v873
        %892 = vst [vmem:[%s248] sm:$0xff] %v876
        %893 = vst [vmem:[%s248 + $0x8] sm:$0xff] %v877
        %894 = vst [vmem:[%s248 + $0x20] sm:$0xff] %v878
        %895 = vst [vmem:[%s248 + $0x28] sm:$0xff] %v879
        %896 = vst [vmem:[%s248 + $0x40] sm:$0xff] %v880
        %897 = vst [vmem:[%s248 + $0x48] sm:$0xff] %v881
        %898 = vst [vmem:[%s248 + $0x60] sm:$0xff] %v882
        %899 = vst [vmem:[%s248 + $0x68] sm:$0xff] %v883
        %900 = vst [vmem:[%s248 + $0x80] sm:$0xff] %v884
        %901 = vst [vmem:[%s248 + $0x88] sm:$0xff] %v885
        %902 = vst [vmem:[%s248 + $0xa0] sm:$0xff] %v886
        %903 = vst [vmem:[%s248 + $0xa8] sm:$0xff] %v887
        %904 = vst [vmem:[%s248 + $0xc0] sm:$0xff] %v888
        %905 = vst [vmem:[%s248 + $0xc8] sm:$0xff] %v889
        %906 = vst [vmem:[%s248 + $0xe0] sm:$0xff] %v890
        %907 = vst [vmem:[%s248 + $0xe8] sm:$0xff] %v891
        %s908 = scalar_lea.vmem [#allocation4], 256
        %v909 = vld [vmem:[%s908] sm:$0xff]
        %v910 = vld [vmem:[%s908 + $0x8] sm:$0xff]
        %v911 = vld [vmem:[%s908 + $0x10] sm:$0xff]
        %v912 = vld [vmem:[%s908 + $0x18] sm:$0xff]
        %v913 = vld [vmem:[%s908 + $0x20] sm:$0xff]
        %v914 = vld [vmem:[%s908 + $0x28] sm:$0xff]
        %v915 = vld [vmem:[%s908 + $0x30] sm:$0xff]
        %v916 = vld [vmem:[%s908 + $0x38] sm:$0xff]
        %v917 = vld [vmem:[%s908 + $0x40] sm:$0xff]
        %v918 = vld [vmem:[%s908 + $0x48] sm:$0xff]
        %v919 = vld [vmem:[%s908 + $0x50] sm:$0xff]
        %v920 = vld [vmem:[%s908 + $0x58] sm:$0xff]
        %v921 = vld [vmem:[%s908 + $0x60] sm:$0xff]
        %v922 = vld [vmem:[%s908 + $0x68] sm:$0xff]
        %v923 = vld [vmem:[%s908 + $0x70] sm:$0xff]
        %v924 = vld [vmem:[%s908 + $0x78] sm:$0xff]
        %v925 = vld [vmem:[%s908 + $0x80] sm:$0xff]
        %v926 = vld [vmem:[%s908 + $0x88] sm:$0xff]
        %v927 = vld [vmem:[%s908 + $0x90] sm:$0xff]
        %v928 = vld [vmem:[%s908 + $0x98] sm:$0xff]
        %v929 = vld [vmem:[%s908 + $0xa0] sm:$0xff]
        %v930 = vld [vmem:[%s908 + $0xa8] sm:$0xff]
        %v931 = vld [vmem:[%s908 + $0xb0] sm:$0xff]
        %v932 = vld [vmem:[%s908 + $0xb8] sm:$0xff]
        %v933 = vld [vmem:[%s908 + $0xc0] sm:$0xff]
        %v934 = vld [vmem:[%s908 + $0xc8] sm:$0xff]
        %v935 = vld [vmem:[%s908 + $0xd0] sm:$0xff]
        %v936 = vld [vmem:[%s908 + $0xd8] sm:$0xff]
        %v937 = vld [vmem:[%s908 + $0xe0] sm:$0xff]
        %v938 = vld [vmem:[%s908 + $0xe8] sm:$0xff]
        %v939 = vld [vmem:[%s908 + $0xf0] sm:$0xff]
        %v940 = vld [vmem:[%s908 + $0xf8] sm:$0xff]
        %v973 = vunpack.c.l.b16 %v909
        %v974 = vunpack.c.h.b16 %v909
        %v975 = vunpack.c.l.b16 %v910
        %v976 = vunpack.c.h.b16 %v910
        %v977 = vunpack.c.l.b16 %v911
        %v978 = vunpack.c.h.b16 %v911
        %v979 = vunpack.c.l.b16 %v912
        %v980 = vunpack.c.h.b16 %v912
        %v981 = vunpack.c.l.b16 %v913
        %v982 = vunpack.c.h.b16 %v913
        %v983 = vunpack.c.l.b16 %v914
        %v984 = vunpack.c.h.b16 %v914
        %v985 = vunpack.c.l.b16 %v915
        %v986 = vunpack.c.h.b16 %v915
        %v987 = vunpack.c.l.b16 %v916
        %v988 = vunpack.c.h.b16 %v916
        %v989 = vunpack.c.l.b16 %v917
        %v990 = vunpack.c.h.b16 %v917
        %v991 = vunpack.c.l.b16 %v918
        %v992 = vunpack.c.h.b16 %v918
        %v993 = vunpack.c.l.b16 %v919
        %v994 = vunpack.c.h.b16 %v919
        %v995 = vunpack.c.l.b16 %v920
        %v996 = vunpack.c.h.b16 %v920
        %v997 = vunpack.c.l.b16 %v921
        %v998 = vunpack.c.h.b16 %v921
        %v999 = vunpack.c.l.b16 %v922
        %v1000 = vunpack.c.h.b16 %v922
        %v1001 = vunpack.c.l.b16 %v923
        %v1002 = vunpack.c.h.b16 %v923
        %v1003 = vunpack.c.l.b16 %v924
        %v1004 = vunpack.c.h.b16 %v924
        %v1005 = vunpack.c.l.b16 %v925
        %v1006 = vunpack.c.h.b16 %v925
        %v1007 = vunpack.c.l.b16 %v926
        %v1008 = vunpack.c.h.b16 %v926
        %v1009 = vunpack.c.l.b16 %v927
        %v1010 = vunpack.c.h.b16 %v927
        %v1011 = vunpack.c.l.b16 %v928
        %v1012 = vunpack.c.h.b16 %v928
        %v1013 = vunpack.c.l.b16 %v929
        %v1014 = vunpack.c.h.b16 %v929
        %v1015 = vunpack.c.l.b16 %v930
        %v1016 = vunpack.c.h.b16 %v930
        %v1017 = vunpack.c.l.b16 %v931
        %v1018 = vunpack.c.h.b16 %v931
        %v1019 = vunpack.c.l.b16 %v932
        %v1020 = vunpack.c.h.b16 %v932
        %v1021 = vunpack.c.l.b16 %v933
        %v1022 = vunpack.c.h.b16 %v933
        %v1023 = vunpack.c.l.b16 %v934
        %v1024 = vunpack.c.h.b16 %v934
        %v1025 = vunpack.c.l.b16 %v935
        %v1026 = vunpack.c.h.b16 %v935
        %v1027 = vunpack.c.l.b16 %v936
        %v1028 = vunpack.c.h.b16 %v936
        %v1029 = vunpack.c.l.b16 %v937
        %v1030 = vunpack.c.h.b16 %v937
        %v1031 = vunpack.c.l.b16 %v938
        %v1032 = vunpack.c.h.b16 %v938
        %v1033 = vunpack.c.l.b16 %v939
        %v1034 = vunpack.c.h.b16 %v939
        %v1035 = vunpack.c.l.b16 %v940
        %v1036 = vunpack.c.h.b16 %v940
        %v1037 = vpack.c.b16 %v975, %v973
        %v1038 = vpack.c.b16 %v976, %v974
        %v1039 = vpack.c.b16 %v979, %v977
        %v1040 = vpack.c.b16 %v980, %v978
        %v1041 = vpack.c.b16 %v983, %v981
        %v1042 = vpack.c.b16 %v984, %v982
        %v1043 = vpack.c.b16 %v987, %v985
        %v1044 = vpack.c.b16 %v988, %v986
        %v1045 = vpack.c.b16 %v991, %v989
        %v1046 = vpack.c.b16 %v992, %v990
        %v1047 = vpack.c.b16 %v995, %v993
        %v1048 = vpack.c.b16 %v996, %v994
        %v1049 = vpack.c.b16 %v999, %v997
        %v1050 = vpack.c.b16 %v1000, %v998
        %v1051 = vpack.c.b16 %v1003, %v1001
        %v1052 = vpack.c.b16 %v1004, %v1002
        %v1053 = vpack.c.b16 %v1007, %v1005
        %v1054 = vpack.c.b16 %v1008, %v1006
        %v1055 = vpack.c.b16 %v1011, %v1009
        %v1056 = vpack.c.b16 %v1012, %v1010
        %v1057 = vpack.c.b16 %v1015, %v1013
        %v1058 = vpack.c.b16 %v1016, %v1014
        %v1059 = vpack.c.b16 %v1019, %v1017
        %v1060 = vpack.c.b16 %v1020, %v1018
        %v1061 = vpack.c.b16 %v1023, %v1021
        %v1062 = vpack.c.b16 %v1024, %v1022
        %v1063 = vpack.c.b16 %v1027, %v1025
        %v1064 = vpack.c.b16 %v1028, %v1026
        %v1065 = vpack.c.b16 %v1031, %v1029
        %v1066 = vpack.c.b16 %v1032, %v1030
        %v1067 = vpack.c.b16 %v1035, %v1033
        %v1068 = vpack.c.b16 %v1036, %v1034
        %1101 = vmatprep.subr.bf16.mxu0 %v1052
        %1102 = vmatpush1.bf16.msra.mxu0 %v1051
        %1103 = vmatprep.subr.bf16.mxu0 %v1050
        %1104 = vmatpush1.bf16.msra.mxu0 %v1049
        %1105 = vmatprep.subr.bf16.mxu0 %v1048
        %1106 = vmatpush1.bf16.msra.mxu0 %v1047
        %1107 = vmatprep.subr.bf16.mxu0 %v1046
        %1108 = vmatpush1.bf16.msra.mxu0 %v1045
        %1109 = vmatprep.subr.bf16.mxu0 %v1044
        %1110 = vmatpush1.bf16.msra.mxu0 %v1043
        %1111 = vmatprep.subr.bf16.mxu0 %v1042
        %1112 = vmatpush1.bf16.msra.mxu0 %v1041
        %1113 = vmatprep.subr.bf16.mxu0 %v1040
        %1114 = vmatpush1.bf16.msra.mxu0 %v1039
        %1115 = vmatprep.subr.bf16.mxu0 %v1038
        %1116 = vmatpush1.bf16.msra.mxu0 %v1037
        %1117 = vmatprep.subr.bf16.mxu0 %v1068
        %1118 = vmatpush2.bf16.msra.mxu0 %v1067
        %1119 = vmatprep.subr.bf16.mxu0 %v1066
        %1120 = vmatpush2.bf16.msra.mxu0 %v1065
        %1121 = vmatprep.subr.bf16.mxu0 %v1064
        %1122 = vmatpush2.bf16.msra.mxu0 %v1063
        %1123 = vmatprep.subr.bf16.mxu0 %v1062
        %1124 = vmatpush2.bf16.msra.mxu0 %v1061
        %1125 = vmatprep.subr.bf16.mxu0 %v1060
        %1126 = vmatpush2.bf16.msra.mxu0 %v1059
        %1127 = vmatprep.subr.bf16.mxu0 %v1058
        %1128 = vmatpush2.bf16.msra.mxu0 %v1057
        %1129 = vmatprep.subr.bf16.mxu0 %v1056
        %1130 = vmatpush2.bf16.msra.mxu0 %v1055
        %1131 = vmatprep.subr.bf16.mxu0 %v1054
        %1132 = vmatpush2.bf16.msra.mxu0 %v1053
        %1133 = vmatprep.mubr.bf16.mxu0 %v267
        %1134 = vmatmul.mubr.bf16.gmra.mxu0 %v266
        %v1135 = vpop.f32.mrf.mxu0
        %v1136 = vadd.f32 0.0, %v1135
        %v1137 = vpop.f32.mrf.mxu0
        %v1138 = vadd.f32 0.0, %v1137
        %v1139 = vpop.f32.mrf.mxu0
        %v1140 = vadd.f32 0.0, %v1139
        %v1141 = vpop.f32.mrf.mxu0
        %v1142 = vadd.f32 0.0, %v1141
        %1143 = vmatprep.mubr.bf16.mxu0 %v269
        %1144 = vmatmul.mubr.bf16.gmra.mxu0 %v268
        %v1145 = vpop.f32.mrf.mxu0
        %v1146 = vadd.f32 0.0, %v1145
        %v1147 = vpop.f32.mrf.mxu0
        %v1148 = vadd.f32 0.0, %v1147
        %v1149 = vpop.f32.mrf.mxu0
        %v1150 = vadd.f32 0.0, %v1149
        %v1151 = vpop.f32.mrf.mxu0
        %v1152 = vadd.f32 0.0, %v1151
        %1153 = vmatprep.mubr.bf16.mxu0 %v271
        %1154 = vmatmul.mubr.bf16.gmra.mxu0 %v270
        %v1155 = vpop.f32.mrf.mxu0
        %v1156 = vadd.f32 0.0, %v1155
        %v1157 = vpop.f32.mrf.mxu0
        %v1158 = vadd.f32 0.0, %v1157
        %v1159 = vpop.f32.mrf.mxu0
        %v1160 = vadd.f32 0.0, %v1159
        %v1161 = vpop.f32.mrf.mxu0
        %v1162 = vadd.f32 0.0, %v1161
        %1163 = vmatprep.mubr.bf16.mxu0 %v273
        %1164 = vmatmul.mubr.bf16.gmra.mxu0 %v272
        %v1165 = vpop.f32.mrf.mxu0
        %v1166 = vadd.f32 0.0, %v1165
        %v1167 = vpop.f32.mrf.mxu0
        %v1168 = vadd.f32 0.0, %v1167
        %v1169 = vpop.f32.mrf.mxu0
        %v1170 = vadd.f32 0.0, %v1169
        %v1171 = vpop.f32.mrf.mxu0
        %v1172 = vadd.f32 0.0, %v1171
        %1173 = vdwg.mxu0
        %v1174 = vadd.f32 %v1136, %v1138
        %1175 = vadd.xlane.f32.xlu0 %v1174
        %v1176 = vpop.xlane.xlu0 %1175
        %v1177 = vadd.f32 %v1140, %v1142
        %1178 = vadd.xlane.f32.xlu0 %v1177
        %v1179 = vpop.xlane.xlu0 %1178
        %v1180 = vadd.f32 %v1146, %v1148
        %1181 = vadd.xlane.f32.xlu0 %v1180
        %v1182 = vpop.xlane.xlu0 %1181
        %v1183 = vadd.f32 %v1150, %v1152
        %1184 = vadd.xlane.f32.xlu0 %v1183
        %v1185 = vpop.xlane.xlu0 %1184
        %v1186 = vadd.f32 %v1156, %v1158
        %1187 = vadd.xlane.f32.xlu0 %v1186
        %v1188 = vpop.xlane.xlu0 %1187
        %v1189 = vadd.f32 %v1160, %v1162
        %1190 = vadd.xlane.f32.xlu0 %v1189
        %v1191 = vpop.xlane.xlu0 %1190
        %v1192 = vadd.f32 %v1166, %v1168
        %1193 = vadd.xlane.f32.xlu0 %v1192
        %v1194 = vpop.xlane.xlu0 %1193
        %v1195 = vadd.f32 %v1170, %v1172
        %1196 = vadd.xlane.f32.xlu0 %v1195
        %v1197 = vpop.xlane.xlu0 %1196
        %v1198 = vsel %vm572, %v1136, 0.0
        %v1199 = vsel %vm573, %v1138, 0.0
        %v1200 = vsel %vm572, %v1140, 0.0
        %v1201 = vsel %vm573, %v1142, 0.0
        %v1202 = vsel %vm572, %v1146, 0.0
        %v1203 = vsel %vm573, %v1148, 0.0
        %v1204 = vsel %vm572, %v1150, 0.0
        %v1205 = vsel %vm573, %v1152, 0.0
        %v1206 = vsel %vm572, %v1156, 0.0
        %v1207 = vsel %vm573, %v1158, 0.0
        %v1208 = vsel %vm572, %v1160, 0.0
        %v1209 = vsel %vm573, %v1162, 0.0
        %v1210 = vsel %vm572, %v1166, 0.0
        %v1211 = vsel %vm573, %v1168, 0.0
        %v1212 = vsel %vm572, %v1170, 0.0
        %v1213 = vsel %vm573, %v1172, 0.0
        %v1214 = vadd.f32 %v1198, %v1199
        %1215 = vadd.xlane.f32.xlu0 %v1214
        %v1216 = vpop.xlane.xlu0 %1215
        %v1217 = vadd.f32 %v1200, %v1201
        %1218 = vadd.xlane.f32.xlu0 %v1217
        %v1219 = vpop.xlane.xlu0 %1218
        %v1220 = vadd.f32 %v1202, %v1203
        %1221 = vadd.xlane.f32.xlu0 %v1220
        %v1222 = vpop.xlane.xlu0 %1221
        %v1223 = vadd.f32 %v1204, %v1205
        %1224 = vadd.xlane.f32.xlu0 %v1223
        %v1225 = vpop.xlane.xlu0 %1224
        %v1226 = vadd.f32 %v1206, %v1207
        %1227 = vadd.xlane.f32.xlu0 %v1226
        %v1228 = vpop.xlane.xlu0 %1227
        %v1229 = vadd.f32 %v1208, %v1209
        %1230 = vadd.xlane.f32.xlu0 %v1229
        %v1231 = vpop.xlane.xlu0 %1230
        %v1232 = vadd.f32 %v1210, %v1211
        %1233 = vadd.xlane.f32.xlu0 %v1232
        %v1234 = vpop.xlane.xlu0 %1233
        %v1235 = vadd.f32 %v1212, %v1213
        %1236 = vadd.xlane.f32.xlu0 %v1235
        %v1237 = vpop.xlane.xlu0 %1236
        %v1238 = vsub.f32 %v1176, %v1216
        %v1239 = vsub.f32 %v1179, %v1219
        %v1240 = vsub.f32 %v1182, %v1222
        %v1241 = vsub.f32 %v1185, %v1225
        %v1242 = vsub.f32 %v1188, %v1228
        %v1243 = vsub.f32 %v1191, %v1231
        %v1244 = vsub.f32 %v1194, %v1234
        %v1245 = vsub.f32 %v1197, %v1237
        %v1246 = vsel %vm572, %v1216, %v1238
        %v1247 = vsel %vm573, %v1216, %v1238
        %v1248 = vsel %vm572, %v1219, %v1239
        %v1249 = vsel %vm573, %v1219, %v1239
        %v1250 = vsel %vm572, %v1222, %v1240
        %v1251 = vsel %vm573, %v1222, %v1240
        %v1252 = vsel %vm572, %v1225, %v1241
        %v1253 = vsel %vm573, %v1225, %v1241
        %v1254 = vsel %vm572, %v1228, %v1242
        %v1255 = vsel %vm573, %v1228, %v1242
        %v1256 = vsel %vm572, %v1231, %v1243
        %v1257 = vsel %vm573, %v1231, %v1243
        %v1258 = vsel %vm572, %v1234, %v1244
        %v1259 = vsel %vm573, %v1234, %v1244
        %v1260 = vsel %vm572, %v1237, %v1245
        %v1261 = vsel %vm573, %v1237, %v1245
        %v1262 = vmul.f32 %v1246, 0.0078125
        %v1263 = vmul.f32 %v1247, 0.0078125
        %v1264 = vmul.f32 %v1248, 0.0078125
        %v1265 = vmul.f32 %v1249, 0.0078125
        %v1266 = vmul.f32 %v1250, 0.0078125
        %v1267 = vmul.f32 %v1251, 0.0078125
        %v1268 = vmul.f32 %v1252, 0.0078125
        %v1269 = vmul.f32 %v1253, 0.0078125
        %v1270 = vmul.f32 %v1254, 0.0078125
        %v1271 = vmul.f32 %v1255, 0.0078125
        %v1272 = vmul.f32 %v1256, 0.0078125
        %v1273 = vmul.f32 %v1257, 0.0078125
        %v1274 = vmul.f32 %v1258, 0.0078125
        %v1275 = vmul.f32 %v1259, 0.0078125
        %v1276 = vmul.f32 %v1260, 0.0078125
        %v1277 = vmul.f32 %v1261, 0.0078125
        %v1278 = vsub.f32 %v1136, %v1262
        %v1279 = vsub.f32 %v1138, %v1263
        %v1280 = vsub.f32 %v1140, %v1264
        %v1281 = vsub.f32 %v1142, %v1265
        %v1282 = vsub.f32 %v1146, %v1266
        %v1283 = vsub.f32 %v1148, %v1267
        %v1284 = vsub.f32 %v1150, %v1268
        %v1285 = vsub.f32 %v1152, %v1269
        %v1286 = vsub.f32 %v1156, %v1270
        %v1287 = vsub.f32 %v1158, %v1271
        %v1288 = vsub.f32 %v1160, %v1272
        %v1289 = vsub.f32 %v1162, %v1273
        %v1290 = vsub.f32 %v1166, %v1274
        %v1291 = vsub.f32 %v1168, %v1275
        %v1292 = vsub.f32 %v1170, %v1276
        %v1293 = vsub.f32 %v1172, %v1277
        %v1294 = vmul.f32 %v1278, %v1278
        %v1295 = vmul.f32 %v1279, %v1279
        %v1296 = vmul.f32 %v1280, %v1280
        %v1297 = vmul.f32 %v1281, %v1281
        %v1298 = vmul.f32 %v1282, %v1282
        %v1299 = vmul.f32 %v1283, %v1283
        %v1300 = vmul.f32 %v1284, %v1284
        %v1301 = vmul.f32 %v1285, %v1285
        %v1302 = vmul.f32 %v1286, %v1286
        %v1303 = vmul.f32 %v1287, %v1287
        %v1304 = vmul.f32 %v1288, %v1288
        %v1305 = vmul.f32 %v1289, %v1289
        %v1306 = vmul.f32 %v1290, %v1290
        %v1307 = vmul.f32 %v1291, %v1291
        %v1308 = vmul.f32 %v1292, %v1292
        %v1309 = vmul.f32 %v1293, %v1293
        %v1310 = vadd.f32 %v1294, %v1295
        %1311 = vadd.xlane.f32.xlu0 %v1310
        %v1312 = vpop.xlane.xlu0 %1311
        %v1313 = vadd.f32 %v1296, %v1297
        %1314 = vadd.xlane.f32.xlu0 %v1313
        %v1315 = vpop.xlane.xlu0 %1314
        %v1316 = vadd.f32 %v1298, %v1299
        %1317 = vadd.xlane.f32.xlu0 %v1316
        %v1318 = vpop.xlane.xlu0 %1317
        %v1319 = vadd.f32 %v1300, %v1301
        %1320 = vadd.xlane.f32.xlu0 %v1319
        %v1321 = vpop.xlane.xlu0 %1320
        %v1322 = vadd.f32 %v1302, %v1303
        %1323 = vadd.xlane.f32.xlu0 %v1322
        %v1324 = vpop.xlane.xlu0 %1323
        %v1325 = vadd.f32 %v1304, %v1305
        %1326 = vadd.xlane.f32.xlu0 %v1325
        %v1327 = vpop.xlane.xlu0 %1326
        %v1328 = vadd.f32 %v1306, %v1307
        %1329 = vadd.xlane.f32.xlu0 %v1328
        %v1330 = vpop.xlane.xlu0 %1329
        %v1331 = vadd.f32 %v1308, %v1309
        %1332 = vadd.xlane.f32.xlu0 %v1331
        %v1333 = vpop.xlane.xlu0 %1332
        %v1334 = vsel %vm572, %v1294, 0.0
        %v1335 = vsel %vm573, %v1295, 0.0
        %v1336 = vsel %vm572, %v1296, 0.0
        %v1337 = vsel %vm573, %v1297, 0.0
        %v1338 = vsel %vm572, %v1298, 0.0
        %v1339 = vsel %vm573, %v1299, 0.0
        %v1340 = vsel %vm572, %v1300, 0.0
        %v1341 = vsel %vm573, %v1301, 0.0
        %v1342 = vsel %vm572, %v1302, 0.0
        %v1343 = vsel %vm573, %v1303, 0.0
        %v1344 = vsel %vm572, %v1304, 0.0
        %v1345 = vsel %vm573, %v1305, 0.0
        %v1346 = vsel %vm572, %v1306, 0.0
        %v1347 = vsel %vm573, %v1307, 0.0
        %v1348 = vsel %vm572, %v1308, 0.0
        %v1349 = vsel %vm573, %v1309, 0.0
        %v1350 = vadd.f32 %v1334, %v1335
        %1351 = vadd.xlane.f32.xlu0 %v1350
        %v1352 = vpop.xlane.xlu0 %1351
        %v1353 = vadd.f32 %v1336, %v1337
        %1354 = vadd.xlane.f32.xlu0 %v1353
        %v1355 = vpop.xlane.xlu0 %1354
        %v1356 = vadd.f32 %v1338, %v1339
        %1357 = vadd.xlane.f32.xlu0 %v1356
        %v1358 = vpop.xlane.xlu0 %1357
        %v1359 = vadd.f32 %v1340, %v1341
        %1360 = vadd.xlane.f32.xlu0 %v1359
        %v1361 = vpop.xlane.xlu0 %1360
        %v1362 = vadd.f32 %v1342, %v1343
        %1363 = vadd.xlane.f32.xlu0 %v1362
        %v1364 = vpop.xlane.xlu0 %1363
        %v1365 = vadd.f32 %v1344, %v1345
        %1366 = vadd.xlane.f32.xlu0 %v1365
        %v1367 = vpop.xlane.xlu0 %1366
        %v1368 = vadd.f32 %v1346, %v1347
        %1369 = vadd.xlane.f32.xlu0 %v1368
        %v1370 = vpop.xlane.xlu0 %1369
        %v1371 = vadd.f32 %v1348, %v1349
        %1372 = vadd.xlane.f32.xlu0 %v1371
        %v1373 = vpop.xlane.xlu0 %1372
        %v1374 = vsub.f32 %v1312, %v1352
        %v1375 = vsub.f32 %v1315, %v1355
        %v1376 = vsub.f32 %v1318, %v1358
        %v1377 = vsub.f32 %v1321, %v1361
        %v1378 = vsub.f32 %v1324, %v1364
        %v1379 = vsub.f32 %v1327, %v1367
        %v1380 = vsub.f32 %v1330, %v1370
        %v1381 = vsub.f32 %v1333, %v1373
        %v1382 = vsel %vm572, %v1352, %v1374
        %v1383 = vsel %vm573, %v1352, %v1374
        %v1384 = vsel %vm572, %v1355, %v1375
        %v1385 = vsel %vm573, %v1355, %v1375
        %v1386 = vsel %vm572, %v1358, %v1376
        %v1387 = vsel %vm573, %v1358, %v1376
        %v1388 = vsel %vm572, %v1361, %v1377
        %v1389 = vsel %vm573, %v1361, %v1377
        %v1390 = vsel %vm572, %v1364, %v1378
        %v1391 = vsel %vm573, %v1364, %v1378
        %v1392 = vsel %vm572, %v1367, %v1379
        %v1393 = vsel %vm573, %v1367, %v1379
        %v1394 = vsel %vm572, %v1370, %v1380
        %v1395 = vsel %vm573, %v1370, %v1380
        %v1396 = vsel %vm572, %v1373, %v1381
        %v1397 = vsel %vm573, %v1373, %v1381
        %v1398 = vmul.f32 %v1382, 0.0078125
        %v1399 = vmul.f32 %v1383, 0.0078125
        %v1400 = vmul.f32 %v1384, 0.0078125
        %v1401 = vmul.f32 %v1385, 0.0078125
        %v1402 = vmul.f32 %v1386, 0.0078125
        %v1403 = vmul.f32 %v1387, 0.0078125
        %v1404 = vmul.f32 %v1388, 0.0078125
        %v1405 = vmul.f32 %v1389, 0.0078125
        %v1406 = vmul.f32 %v1390, 0.0078125
        %v1407 = vmul.f32 %v1391, 0.0078125
        %v1408 = vmul.f32 %v1392, 0.0078125
        %v1409 = vmul.f32 %v1393, 0.0078125
        %v1410 = vmul.f32 %v1394, 0.0078125
        %v1411 = vmul.f32 %v1395, 0.0078125
        %v1412 = vmul.f32 %v1396, 0.0078125
        %v1413 = vmul.f32 %v1397, 0.0078125
        %v1414 = vadd.f32 %v1398, 1e-05
        %v1415 = vadd.f32 %v1399, 1e-05
        %v1416 = vadd.f32 %v1400, 1e-05
        %v1417 = vadd.f32 %v1401, 1e-05
        %v1418 = vadd.f32 %v1402, 1e-05
        %v1419 = vadd.f32 %v1403, 1e-05
        %v1420 = vadd.f32 %v1404, 1e-05
        %v1421 = vadd.f32 %v1405, 1e-05
        %v1422 = vadd.f32 %v1406, 1e-05
        %v1423 = vadd.f32 %v1407, 1e-05
        %v1424 = vadd.f32 %v1408, 1e-05
        %v1425 = vadd.f32 %v1409, 1e-05
        %v1426 = vadd.f32 %v1410, 1e-05
        %v1427 = vadd.f32 %v1411, 1e-05
        %v1428 = vadd.f32 %v1412, 1e-05
        %v1429 = vadd.f32 %v1413, 1e-05
        %v1430 = vrsqrt.pop %v1414
        %v1431 = vrsqrt.pop %v1415
        %v1432 = vrsqrt.pop %v1416
        %v1433 = vrsqrt.pop %v1417
        %v1434 = vrsqrt.pop %v1418
        %v1435 = vrsqrt.pop %v1419
        %v1436 = vrsqrt.pop %v1420
        %v1437 = vrsqrt.pop %v1421
        %v1438 = vrsqrt.pop %v1422
        %v1439 = vrsqrt.pop %v1423
        %v1440 = vrsqrt.pop %v1424
        %v1441 = vrsqrt.pop %v1425
        %v1442 = vrsqrt.pop %v1426
        %v1443 = vrsqrt.pop %v1427
        %v1444 = vrsqrt.pop %v1428
        %v1445 = vrsqrt.pop %v1429
        %v1446 = vmul.f32 %v1278, %v1430
        %v1447 = vmul.f32 %v1279, %v1431
        %v1448 = vmul.f32 %v1280, %v1432
        %v1449 = vmul.f32 %v1281, %v1433
        %v1450 = vmul.f32 %v1282, %v1434
        %v1451 = vmul.f32 %v1283, %v1435
        %v1452 = vmul.f32 %v1284, %v1436
        %v1453 = vmul.f32 %v1285, %v1437
        %v1454 = vmul.f32 %v1286, %v1438
        %v1455 = vmul.f32 %v1287, %v1439
        %v1456 = vmul.f32 %v1288, %v1440
        %v1457 = vmul.f32 %v1289, %v1441
        %v1458 = vmul.f32 %v1290, %v1442
        %v1459 = vmul.f32 %v1291, %v1443
        %v1460 = vmul.f32 %v1292, %v1444
        %v1461 = vmul.f32 %v1293, %v1445
        %v1462 = vmul.f32 %v1446, %v842
        %v1463 = vmul.f32 %v1447, %v846
        %v1464 = vmul.f32 %v1448, %v842
        %v1465 = vmul.f32 %v1449, %v846
        %v1466 = vmul.f32 %v1450, %v842
        %v1467 = vmul.f32 %v1451, %v846
        %v1468 = vmul.f32 %v1452, %v842
        %v1469 = vmul.f32 %v1453, %v846
        %v1470 = vmul.f32 %v1454, %v842
        %v1471 = vmul.f32 %v1455, %v846
        %v1472 = vmul.f32 %v1456, %v842
        %v1473 = vmul.f32 %v1457, %v846
        %v1474 = vmul.f32 %v1458, %v842
        %v1475 = vmul.f32 %v1459, %v846
        %v1476 = vmul.f32 %v1460, %v842
        %v1477 = vmul.f32 %v1461, %v846
        %v1478 = vadd.f32 %v1462, %v869
        %v1479 = vadd.f32 %v1463, %v873
        %v1480 = vadd.f32 %v1464, %v869
        %v1481 = vadd.f32 %v1465, %v873
        %v1482 = vadd.f32 %v1466, %v869
        %v1483 = vadd.f32 %v1467, %v873
        %v1484 = vadd.f32 %v1468, %v869
        %v1485 = vadd.f32 %v1469, %v873
        %v1486 = vadd.f32 %v1470, %v869
        %v1487 = vadd.f32 %v1471, %v873
        %v1488 = vadd.f32 %v1472, %v869
        %v1489 = vadd.f32 %v1473, %v873
        %v1490 = vadd.f32 %v1474, %v869
        %v1491 = vadd.f32 %v1475, %v873
        %v1492 = vadd.f32 %v1476, %v869
        %v1493 = vadd.f32 %v1477, %v873
        %s1494 = scalar_lea.vmem %s248, 16
        %1495 = vst [vmem:[%s1494] sm:$0xff] %v1478
        %1496 = vst [vmem:[%s1494 + $0x8] sm:$0xff] %v1479
        %1497 = vst [vmem:[%s1494 + $0x20] sm:$0xff] %v1480
        %1498 = vst [vmem:[%s1494 + $0x28] sm:$0xff] %v1481
        %1499 = vst [vmem:[%s1494 + $0x40] sm:$0xff] %v1482
        %1500 = vst [vmem:[%s1494 + $0x48] sm:$0xff] %v1483
        %1501 = vst [vmem:[%s1494 + $0x60] sm:$0xff] %v1484
        %1502 = vst [vmem:[%s1494 + $0x68] sm:$0xff] %v1485
        %1503 = vst [vmem:[%s1494 + $0x80] sm:$0xff] %v1486
        %1504 = vst [vmem:[%s1494 + $0x88] sm:$0xff] %v1487
        %1505 = vst [vmem:[%s1494 + $0xa0] sm:$0xff] %v1488
        %1506 = vst [vmem:[%s1494 + $0xa8] sm:$0xff] %v1489
        %1507 = vst [vmem:[%s1494 + $0xc0] sm:$0xff] %v1490
        %1508 = vst [vmem:[%s1494 + $0xc8] sm:$0xff] %v1491
        %1509 = vst [vmem:[%s1494 + $0xe0] sm:$0xff] %v1492
        %1510 = vst [vmem:[%s1494 + $0xe8] sm:$0xff] %v1493
        %s1511 = smul.u32 8, %s19
        %p1512 = scmp.lt.s32.totalorder %s1511, 15
        %s1513 = scalar_select %p1512, %s1511, 15
        %s1514 = smul.addr %s1513, 4
        %s1515 = smul.addr %s1514, 8
        %s1516 = scalar_lea.vmem %s4, %s1515
        // Predicated region
        $region49: #{patch_expand_forward.1} parent=35 // pred_check
          %p1517 = pneg %p126
        $region50: #{patch_expand_forward.1} parent=35 // pred_check_branch
          %1519 = sbr.rel (%p1517) target = $region52
        $region51: #{patch_expand_forward.1} parent=35 // pred_region
          %s1520 = smul.u32 8, %s19
        $region52: #{patch_expand_forward.1} parent=35 // pred_fallthru
          _
      $region36: #{patch_expand_forward.1} parent=5 // pred_fallthru
        _
      %p1521 = scmp.le.s32.totalorder 2, %s14
      // Predicated region
      $region53: #{patch_expand_forward.1} parent=5 // pred_check
        %p1522 = pneg %p1521
      $region54: #{patch_expand_forward.1} parent=5 // pred_check_branch
        %1524 = sbr.rel (%p1522) target = $region56
      $region55: #{patch_expand_forward.1} parent=5 // pred_region
        %s1525 = ssub.s32 %s14, 2
        // Predicated region
        $region57: #{patch_expand_forward.1} parent=55 // pred_check
          %p1526 = pneg %p132
        $region58: #{patch_expand_forward.1} parent=55 // pred_check_branch
          %1528 = sbr.rel (%p1526) target = $region60
        $region59: #{patch_expand_forward.1} parent=55 // pred_region
          %s1529 = smul.u32 8, %s20
          %p1530 = scmp.lt.s32.totalorder %s1529, 15
          %s1531 = scalar_select %p1530, %s1529, 15
          %s1532 = smul.addr %s1531, 4
          %s1533 = smul.addr %s1532, 8
          %s1534 = scalar_lea.vmem %s4, %s1533
        $region60: #{patch_expand_forward.1} parent=55 // pred_fallthru
          _
      $region56: #{patch_expand_forward.1} parent=5 // pred_fallthru
        _
    $region6: #{patch_expand_forward.1} parent=1 // loop_footer
      %s18 = sadd.s32 1, %s14
    $region7: #{patch_expand_forward.1} parent=1 // loop_footer_branch
      %13 = sbr.rel target = $region3
    $region8: #{patch_expand_forward.1} parent=1 // loop_exit
      _
    %1535 = vsyncpa [#allocation3], 1
    %s1536 = scalar_lea.sflag [#allocation3], 1
    %1537 = vsyncpa %s1536, 1
    %1538 = vsyncpa [#allocation5], 1

</llo_original>
